<compile_context>
chip_gen: v6e
topology: v6e:2x2x1
jax: 0.10.0
libtpu: 0.0.40
codegen_flags: <defaults>
</compile_context>

<pallas_src>
import functools
import math

import jax
import jax.numpy as jnp
import numpy as np
from jax.experimental import pallas as pl
from jax.experimental.pallas import tpu as pltpu


def _encoder_kernel(x_ref, wqkv_t_ref, bqkv_ref, wo_t_ref, bo_ref,
                    w1_t_ref, b1_ref, w2_t_ref, b2_ref,
                    g1_ref, be1_ref, g2_ref, be2_ref,
                    out_ref, *, nb, seq_len, nhead, eps):
    E = out_ref.shape[-1]
    hd = E // nhead
    rows = nb * seq_len

    x = x_ref[...]                                        # (rows, E) f32
    xb = x.astype(jnp.bfloat16)

    # ---------------- fused QKV projection (batch folded into M) -------------
    # 1/sqrt(hd) is already folded into the q part of wqkv_t / bqkv (wrapper).
    qkv = jnp.dot(xb, wqkv_t_ref[...], preferred_element_type=jnp.float32)
    qkv = qkv + bqkv_ref[...]                             # (rows, 3E) f32

    q3 = qkv[:, :E].reshape(nb, seq_len, E)
    k3 = qkv[:, E:2 * E].reshape(nb, seq_len, E)
    v3 = qkv[:, 2 * E:].reshape(nb, seq_len, E)

    # ---------------- multi-head attention ----------------
    # Per-head loop, batched over the batch tile; the head concat is folded
    # into the output-projection accumulation (no lane concat / ctx slab).
    wo_full = wo_t_ref[...]                               # (E, E) bf16
    attn = jnp.zeros((rows, E), jnp.float32)
    for h in range(nhead):                                # static unroll
        sl = slice(h * hd, (h + 1) * hd)
        qh = q3[:, :, sl].astype(jnp.bfloat16)            # (nb, L, hd)
        kh = k3[:, :, sl].astype(jnp.bfloat16)
        vh = v3[:, :, sl].astype(jnp.bfloat16)
        s = jnp.einsum('bld,bmd->blm', qh, kh,
                       preferred_element_type=jnp.float32)        # (nb, L, L)
        s = s - jnp.max(s, axis=-1, keepdims=True)
        p = jnp.exp(s)
        p = p * pl.reciprocal(jnp.sum(p, axis=-1, keepdims=True), approx=True)
        ctx = jnp.einsum('blm,bmd->bld', p.astype(jnp.bfloat16), vh,
                         preferred_element_type=jnp.float32)      # (nb, L, hd)
        attn = attn + jnp.dot(ctx.reshape(rows, hd).astype(jnp.bfloat16),
                              wo_full[sl, :],
                              preferred_element_type=jnp.float32)
    attn = attn + bo_ref[...]

    src = x + attn                                        # dropout1 = identity

    # ---------------- LayerNorm 1 (f32) ----------------
    mu = jnp.mean(src, axis=-1, keepdims=True)
    var = jnp.mean((src - mu) ** 2, axis=-1, keepdims=True)
    src = (src - mu) * jax.lax.rsqrt(var + eps) * g1_ref[...] + be1_ref[...]

    # ---------------- feed-forward (batch folded into M) ----------------
    hidden = jnp.dot(src.astype(jnp.bfloat16), w1_t_ref[...],
                     preferred_element_type=jnp.float32) + b1_ref[...]
    hidden = jnp.maximum(hidden, 0.0)                     # ReLU (dropout = identity)
    ff = jnp.dot(hidden.astype(jnp.bfloat16), w2_t_ref[...],
                 preferred_element_type=jnp.float32) + b2_ref[...]
    src = src + ff                                        # dropout2 = identity

    # ---------------- LayerNorm 2 (f32) ----------------
    mu = jnp.mean(src, axis=-1, keepdims=True)
    var = jnp.mean((src - mu) ** 2, axis=-1, keepdims=True)
    out_ref[...] = (src - mu) * jax.lax.rsqrt(var + eps) * g2_ref[...] + be2_ref[...]


def graph_structural_encoder(src, params, nhead, *, eps=1e-5):
    """src: (L, N, E) float32 (seq-first, nn.MultiheadAttention default)."""
    (wqkv, bqkv, wo, bo, w1, b1, w2, b2, g1, be1, g2, be2) = params
    L, N, E = src.shape
    Fd = w1.shape[0]
    assert E % nhead == 0
    hd = E // nhead

    # Batch-tile: fold enough batch elements per grid step for >=128 MXU rows
    # (or the whole batch if smaller).  Keep a parallel grid axis when N allows
    # so v7x's two TensorCores both get work.
    nb = max(1, min(N, max(1, 128 // max(L, 1))))
    while N % nb:
        nb -= 1
    if (nb * L) % 8 != 0 and nb != N:
        nb = N                                            # keep blocks sublane-legal
    rows = nb * L

    # ---- one-time weight preprocessing (XLA side, outside the kernel) -------
    scale = 1.0 / math.sqrt(hd)                           # folded into q projection
    qkv_scale = jnp.concatenate(
        [jnp.full((E,), scale, jnp.float32), jnp.ones((2 * E,), jnp.float32)])
    wqkv_t = (wqkv * qkv_scale[:, None]).T.astype(jnp.bfloat16)   # (E, 3E)
    bqkv_s = (bqkv.reshape(1, 3 * E) * qkv_scale[None, :]).astype(jnp.float32)
    wo_t = wo.T.astype(jnp.bfloat16)                                # (E, E)
    w1_t = w1.T.astype(jnp.bfloat16)                                # (E, Fd)
    w2_t = w2.T.astype(jnp.bfloat16)                                # (Fd, E)
    bo2, b12, b22 = bo.reshape(1, E), b1.reshape(1, Fd), b2.reshape(1, E)
    g1r, be1r = g1.reshape(1, E), be1.reshape(1, E)
    g2r, be2r = g2.reshape(1, E), be2.reshape(1, E)

    # (L, N, E) -> (N*L, E): batch-contiguous rows, one MXU slab per grid step.
    x2d = jnp.transpose(src, (1, 0, 2)).reshape(N * L, E)

    full = lambda arr: pl.BlockSpec(arr.shape, lambda b: (0, 0))

    out2d = pl.pallas_call(
        functools.partial(_encoder_kernel, nb=nb, seq_len=L, nhead=nhead, eps=eps),
        out_shape=jax.ShapeDtypeStruct((N * L, E), jnp.float32),
        grid_spec=pltpu.PrefetchScalarGridSpec(
            num_scalar_prefetch=0,
            grid=(N // nb,),
            in_specs=[
                pl.BlockSpec((rows, E), lambda b: (b, 0)),   # activation row slab
                full(wqkv_t), full(bqkv_s),                  # in_proj (pre-T, bf16)
                full(wo_t), full(bo2),                       # out_proj
                full(w1_t), full(b12),                       # linear1
                full(w2_t), full(b22),                       # linear2
                full(g1r), full(be1r),                       # norm1
                full(g2r), full(be2r),                       # norm2
            ],
            out_specs=pl.BlockSpec((rows, E), lambda b: (b, 0)),
        ),
        compiler_params=pltpu.CompilerParams(
            dimension_semantics=("parallel",)),
    )(x2d, wqkv_t, bqkv_s, wo_t, bo2, w1_t, b12, w2_t, b22, g1r, be1r, g2r, be2r)

    return out2d.reshape(N, L, E).transpose(1, 0, 2)      # back to (L, N, E)


def reference(src, params, nhead):
    """Pure-JAX f32 reference of the PyTorch forward (eval mode)."""
    (wqkv, bqkv, wo, bo, w1, b1, w2, b2, g1, be1, g2, be2) = params
    L, N, E = src.shape
    hd = E // nhead
    x = src
    qkv = jnp.einsum('lne,fe->lnf', x, wqkv) + bqkv.reshape(-1)
    q, k, v = jnp.split(qkv, 3, axis=-1)
    to_heads = lambda t: t.reshape(L, N, nhead, hd).transpose(1, 2, 0, 3)  # (N,h,L,hd)
    qh, kh, vh = to_heads(q), to_heads(k), to_heads(v)
    s = jnp.einsum('nhld,nhmd->nhlm', qh, kh) / np.sqrt(hd)
    p = jax.nn.softmax(s, axis=-1)
    ctx = jnp.einsum('nhlm,nhmd->nhld', p, vh)
    ctx = ctx.transpose(2, 0, 1, 3).reshape(L, N, E)
    attn = jnp.einsum('lne,fe->lnf', ctx, wo) + bo.reshape(-1)
    s1 = x + attn

    def ln(t, g, b):
        mu = t.mean(-1, keepdims=True)
        var = ((t - mu) ** 2).mean(-1, keepdims=True)
        return (t - mu) / jnp.sqrt(var + 1e-5) * g.reshape(-1) + b.reshape(-1)

    s1 = ln(s1, g1, be1)
    h1 = jax.nn.relu(jnp.einsum('lne,fe->lnf', s1, w1) + b1.reshape(-1))
    ff = jnp.einsum('lnf,ef->lne', h1, w2) + b2.reshape(-1)
    return ln(s1 + ff, g2, be2)


def make_params(key, d_model, nhead, dim_feedforward):
    ks = jax.random.split(key, 8)
    f32 = jnp.float32
    wqkv = 0.05 * jax.random.normal(ks[0], (3 * d_model, d_model), f32)
    bqkv = 0.05 * jax.random.normal(ks[1], (1, 3 * d_model), f32)
    wo = 0.05 * jax.random.normal(ks[2], (d_model, d_model), f32)
    bo = 0.05 * jax.random.normal(ks[3], (1, d_model), f32)
    w1 = 0.05 * jax.random.normal(ks[4], (dim_feedforward, d_model), f32)
    b1 = 0.05 * jax.random.normal(ks[5], (1, dim_feedforward), f32)
    w2 = 0.05 * jax.random.normal(ks[6], (d_model, dim_feedforward), f32)
    b2 = 0.05 * jax.random.normal(ks[7], (1, d_model), f32)
    g1 = jnp.ones((1, d_model), f32)
    be1 = jnp.zeros((1, d_model), f32)
    g2 = jnp.ones((1, d_model), f32)
    be2 = jnp.zeros((1, d_model), f32)
    return (wqkv, bqkv, wo, bo, w1, b1, w2, b2, g1, be1, g2, be2)


if __name__ == "__main__":
    L, N, E = 8, 2, 32          # seq, batch, d_model
    NHEAD = 4
    DIM_FF = 64

    key = jax.random.PRNGKey(0)
    k_x, k_p = jax.random.split(key)
    src = jax.random.normal(k_x, (L, N, E), jnp.float32)
    params = make_params(k_p, E, NHEAD, DIM_FF)

    out = graph_structural_encoder(src, params, NHEAD)
    out = jax.block_until_ready(out)

    ref = jax.block_until_ready(reference(src, params, NHEAD))
    np.testing.assert_allclose(np.asarray(out), np.asarray(ref), atol=5e-2, rtol=5e-2)

    print("KERNEL_OK")
</pallas_src>

<mosaic_0001>
module attributes {stable_mosaic.version = 11 : i64} {
  func.func @_encoder_kernel(%arg0: i32, %arg1: memref<16x32xf32, #tpu.memory_space<vmem>>, %arg2: memref<32x96xbf16, #tpu.memory_space<vmem>>, %arg3: memref<1x96xf32, #tpu.memory_space<vmem>>, %arg4: memref<32x32xbf16, #tpu.memory_space<vmem>>, %arg5: memref<1x32xf32, #tpu.memory_space<vmem>>, %arg6: memref<32x64xbf16, #tpu.memory_space<vmem>>, %arg7: memref<1x64xf32, #tpu.memory_space<vmem>>, %arg8: memref<64x32xbf16, #tpu.memory_space<vmem>>, %arg9: memref<1x32xf32, #tpu.memory_space<vmem>>, %arg10: memref<1x32xf32, #tpu.memory_space<vmem>>, %arg11: memref<1x32xf32, #tpu.memory_space<vmem>>, %arg12: memref<1x32xf32, #tpu.memory_space<vmem>>, %arg13: memref<1x32xf32, #tpu.memory_space<vmem>>, %arg14: memref<16x32xf32, #tpu.memory_space<vmem>>) attributes {dimension_semantics = [#tpu.dimension_semantics<parallel>], iteration_bounds = array<i64: 1>, scalar_prefetch = 0 : i64, scratch_operands = 0 : i64, tpu.core_type = #tpu.core_type<tc>, window_params = [{transform_indices = @transform_0, window_bounds = array<i64: 16, 32>}, {pipeline_mode = #tpu.pipeline_mode<synchronous>, transform_indices = @transform_1, window_bounds = array<i64: 32, 96>}, {pipeline_mode = #tpu.pipeline_mode<synchronous>, transform_indices = @transform_2, window_bounds = array<i64: 1, 96>}, {pipeline_mode = #tpu.pipeline_mode<synchronous>, transform_indices = @transform_3, window_bounds = array<i64: 32, 32>}, {pipeline_mode = #tpu.pipeline_mode<synchronous>, transform_indices = @transform_4, window_bounds = array<i64: 1, 32>}, {pipeline_mode = #tpu.pipeline_mode<synchronous>, transform_indices = @transform_5, window_bounds = array<i64: 32, 64>}, {pipeline_mode = #tpu.pipeline_mode<synchronous>, transform_indices = @transform_6, window_bounds = array<i64: 1, 64>}, {pipeline_mode = #tpu.pipeline_mode<synchronous>, transform_indices = @transform_7, window_bounds = array<i64: 64, 32>}, {pipeline_mode = #tpu.pipeline_mode<synchronous>, transform_indices = @transform_8, window_bounds = array<i64: 1, 32>}, {pipeline_mode = #tpu.pipeline_mode<synchronous>, transform_indices = @transform_9, window_bounds = array<i64: 1, 32>}, {pipeline_mode = #tpu.pipeline_mode<synchronous>, transform_indices = @transform_10, window_bounds = array<i64: 1, 32>}, {pipeline_mode = #tpu.pipeline_mode<synchronous>, transform_indices = @transform_11, window_bounds = array<i64: 1, 32>}, {pipeline_mode = #tpu.pipeline_mode<synchronous>, transform_indices = @transform_12, window_bounds = array<i64: 1, 32>}, {transform_indices = @transform_13, window_bounds = array<i64: 16, 32>}]} {
    %c0 = arith.constant 0 : index
    %c0_0 = arith.constant 0 : index
    %0 = vector.load %arg1[%c0, %c0_0] : memref<16x32xf32, #tpu.memory_space<vmem>>, vector<16x32xf32>
    %1 = arith.truncf %0 : vector<16x32xf32> to vector<16x32xbf16>
    %c0_1 = arith.constant 0 : index
    %c0_2 = arith.constant 0 : index
    %2 = vector.load %arg2[%c0_1, %c0_2] : memref<32x96xbf16, #tpu.memory_space<vmem>>, vector<32x96xbf16>
    %cst = arith.constant dense<0.000000e+00> : vector<16x96xf32>
    %3 = tpu.matmul %1, %2, %cst {dimension_numbers = #tpu.dot_dimension_numbers<[1], [0], [0], [1], [0, 0, 1, 1], [], []>} : vector<16x32xbf16>, vector<32x96xbf16>, vector<16x96xf32> -> vector<16x96xf32>
    %c0_3 = arith.constant 0 : index
    %c0_4 = arith.constant 0 : index
    %4 = vector.load %arg3[%c0_3, %c0_4] : memref<1x96xf32, #tpu.memory_space<vmem>>, vector<1x96xf32>
    %5 = vector.broadcast %4 : vector<1x96xf32> to vector<16x96xf32>
    %6 = arith.addf %3, %5 : vector<16x96xf32>
    %7 = vector.extract_strided_slice %6 {offsets = [0, 0], sizes = [16, 32], strides = [1, 1]} : vector<16x96xf32> to vector<16x32xf32>
    %8 = vector.shape_cast %7 : vector<16x32xf32> to vector<2x8x32xf32>
    %9 = vector.extract_strided_slice %6 {offsets = [0, 32], sizes = [16, 32], strides = [1, 1]} : vector<16x96xf32> to vector<16x32xf32>
    %10 = vector.shape_cast %9 : vector<16x32xf32> to vector<2x8x32xf32>
    %11 = vector.extract_strided_slice %6 {offsets = [0, 64], sizes = [16, 32], strides = [1, 1]} : vector<16x96xf32> to vector<16x32xf32>
    %12 = vector.shape_cast %11 : vector<16x32xf32> to vector<2x8x32xf32>
    %c0_5 = arith.constant 0 : index
    %c0_6 = arith.constant 0 : index
    %13 = vector.load %arg4[%c0_5, %c0_6] : memref<32x32xbf16, #tpu.memory_space<vmem>>, vector<32x32xbf16>
    %cst_7 = arith.constant 0.000000e+00 : f32
    %14 = vector.broadcast %cst_7 : f32 to vector<16x32xf32>
    %15 = vector.extract_strided_slice %8 {offsets = [0, 0, 0], sizes = [2, 8, 8], strides = [1, 1, 1]} : vector<2x8x32xf32> to vector<2x8x8xf32>
    %16 = arith.truncf %15 : vector<2x8x8xf32> to vector<2x8x8xbf16>
    %17 = vector.extract_strided_slice %10 {offsets = [0, 0, 0], sizes = [2, 8, 8], strides = [1, 1, 1]} : vector<2x8x32xf32> to vector<2x8x8xf32>
    %18 = arith.truncf %17 : vector<2x8x8xf32> to vector<2x8x8xbf16>
    %19 = vector.extract_strided_slice %12 {offsets = [0, 0, 0], sizes = [2, 8, 8], strides = [1, 1, 1]} : vector<2x8x32xf32> to vector<2x8x8xf32>
    %20 = arith.truncf %19 : vector<2x8x8xf32> to vector<2x8x8xbf16>
    "tpu.trace_start"() <{level = 10 : i32, message = "bld,bmd->blm"}> : () -> ()
    %cst_8 = arith.constant dense<0.000000e+00> : vector<2x8x8xf32>
    %21 = tpu.matmul %16, %18, %cst_8 {dimension_numbers = #tpu.dot_dimension_numbers<[2], [2], [1], [1], [0, 0, 0, 1, 1, 1], [0], [0]>} : vector<2x8x8xbf16>, vector<2x8x8xbf16>, vector<2x8x8xf32> -> vector<2x8x8xf32>
    "tpu.trace_stop"() : () -> ()
    %cst_9 = arith.constant dense<0xFF800000> : vector<2x8xf32>
    %22 = vector.multi_reduction <maximumf>, %21, %cst_9 [2] : vector<2x8x8xf32> to vector<2x8xf32>
    %23 = vector.shape_cast %22 : vector<2x8xf32> to vector<2x8x1xf32>
    %24 = vector.broadcast %23 : vector<2x8x1xf32> to vector<2x8x8xf32>
    %25 = arith.subf %21, %24 : vector<2x8x8xf32>
    %26 = math.exp %25 : vector<2x8x8xf32>
    %cst_10 = arith.constant dense<0.000000e+00> : vector<2x8xf32>
    %27 = vector.multi_reduction <add>, %26, %cst_10 [2] : vector<2x8x8xf32> to vector<2x8xf32>
    %28 = vector.shape_cast %27 : vector<2x8xf32> to vector<2x8x1xf32>
    %29 = tpu.reciprocal %28 {approx = true} : vector<2x8x1xf32> -> vector<2x8x1xf32>
    %30 = vector.broadcast %29 : vector<2x8x1xf32> to vector<2x8x8xf32>
    %31 = arith.mulf %26, %30 : vector<2x8x8xf32>
    %32 = arith.truncf %31 : vector<2x8x8xf32> to vector<2x8x8xbf16>
    "tpu.trace_start"() <{level = 10 : i32, message = "blm,bmd->bld"}> : () -> ()
    %cst_11 = arith.constant dense<0.000000e+00> : vector<2x8x8xf32>
    %33 = tpu.matmul %32, %20, %cst_11 {dimension_numbers = #tpu.dot_dimension_numbers<[2], [1], [1], [2], [0, 0, 0, 1, 1, 2], [0], [0]>} : vector<2x8x8xbf16>, vector<2x8x8xbf16>, vector<2x8x8xf32> -> vector<2x8x8xf32>
    "tpu.trace_stop"() : () -> ()
    %34 = vector.shape_cast %33 : vector<2x8x8xf32> to vector<16x8xf32>
    %35 = arith.truncf %34 : vector<16x8xf32> to vector<16x8xbf16>
    %36 = vector.extract_strided_slice %13 {offsets = [0, 0], sizes = [8, 32], strides = [1, 1]} : vector<32x32xbf16> to vector<8x32xbf16>
    %cst_12 = arith.constant dense<0.000000e+00> : vector<16x32xf32>
    %37 = tpu.matmul %35, %36, %cst_12 {dimension_numbers = #tpu.dot_dimension_numbers<[1], [0], [0], [1], [0, 0, 1, 1], [], []>} : vector<16x8xbf16>, vector<8x32xbf16>, vector<16x32xf32> -> vector<16x32xf32>
    %38 = arith.addf %14, %37 : vector<16x32xf32>
    %39 = vector.extract_strided_slice %8 {offsets = [0, 0, 8], sizes = [2, 8, 8], strides = [1, 1, 1]} : vector<2x8x32xf32> to vector<2x8x8xf32>
    %40 = arith.truncf %39 : vector<2x8x8xf32> to vector<2x8x8xbf16>
    %41 = vector.extract_strided_slice %10 {offsets = [0, 0, 8], sizes = [2, 8, 8], strides = [1, 1, 1]} : vector<2x8x32xf32> to vector<2x8x8xf32>
    %42 = arith.truncf %41 : vector<2x8x8xf32> to vector<2x8x8xbf16>
    %43 = vector.extract_strided_slice %12 {offsets = [0, 0, 8], sizes = [2, 8, 8], strides = [1, 1, 1]} : vector<2x8x32xf32> to vector<2x8x8xf32>
    %44 = arith.truncf %43 : vector<2x8x8xf32> to vector<2x8x8xbf16>
    "tpu.trace_start"() <{level = 10 : i32, message = "bld,bmd->blm"}> : () -> ()
    %cst_13 = arith.constant dense<0.000000e+00> : vector<2x8x8xf32>
    %45 = tpu.matmul %40, %42, %cst_13 {dimension_numbers = #tpu.dot_dimension_numbers<[2], [2], [1], [1], [0, 0, 0, 1, 1, 1], [0], [0]>} : vector<2x8x8xbf16>, vector<2x8x8xbf16>, vector<2x8x8xf32> -> vector<2x8x8xf32>
    "tpu.trace_stop"() : () -> ()
    %cst_14 = arith.constant dense<0xFF800000> : vector<2x8xf32>
    %46 = vector.multi_reduction <maximumf>, %45, %cst_14 [2] : vector<2x8x8xf32> to vector<2x8xf32>
    %47 = vector.shape_cast %46 : vector<2x8xf32> to vector<2x8x1xf32>
    %48 = vector.broadcast %47 : vector<2x8x1xf32> to vector<2x8x8xf32>
    %49 = arith.subf %45, %48 : vector<2x8x8xf32>
    %50 = math.exp %49 : vector<2x8x8xf32>
    %cst_15 = arith.constant dense<0.000000e+00> : vector<2x8xf32>
    %51 = vector.multi_reduction <add>, %50, %cst_15 [2] : vector<2x8x8xf32> to vector<2x8xf32>
    %52 = vector.shape_cast %51 : vector<2x8xf32> to vector<2x8x1xf32>
    %53 = tpu.reciprocal %52 {approx = true} : vector<2x8x1xf32> -> vector<2x8x1xf32>
    %54 = vector.broadcast %53 : vector<2x8x1xf32> to vector<2x8x8xf32>
    %55 = arith.mulf %50, %54 : vector<2x8x8xf32>
    %56 = arith.truncf %55 : vector<2x8x8xf32> to vector<2x8x8xbf16>
    "tpu.trace_start"() <{level = 10 : i32, message = "blm,bmd->bld"}> : () -> ()
    %cst_16 = arith.constant dense<0.000000e+00> : vector<2x8x8xf32>
    %57 = tpu.matmul %56, %44, %cst_16 {dimension_numbers = #tpu.dot_dimension_numbers<[2], [1], [1], [2], [0, 0, 0, 1, 1, 2], [0], [0]>} : vector<2x8x8xbf16>, vector<2x8x8xbf16>, vector<2x8x8xf32> -> vector<2x8x8xf32>
    "tpu.trace_stop"() : () -> ()
    %58 = vector.shape_cast %57 : vector<2x8x8xf32> to vector<16x8xf32>
    %59 = arith.truncf %58 : vector<16x8xf32> to vector<16x8xbf16>
    %60 = vector.extract_strided_slice %13 {offsets = [8, 0], sizes = [8, 32], strides = [1, 1]} : vector<32x32xbf16> to vector<8x32xbf16>
    %cst_17 = arith.constant dense<0.000000e+00> : vector<16x32xf32>
    %61 = tpu.matmul %59, %60, %cst_17 {dimension_numbers = #tpu.dot_dimension_numbers<[1], [0], [0], [1], [0, 0, 1, 1], [], []>} : vector<16x8xbf16>, vector<8x32xbf16>, vector<16x32xf32> -> vector<16x32xf32>
    %62 = arith.addf %38, %61 : vector<16x32xf32>
    %63 = vector.extract_strided_slice %8 {offsets = [0, 0, 16], sizes = [2, 8, 8], strides = [1, 1, 1]} : vector<2x8x32xf32> to vector<2x8x8xf32>
    %64 = arith.truncf %63 : vector<2x8x8xf32> to vector<2x8x8xbf16>
    %65 = vector.extract_strided_slice %10 {offsets = [0, 0, 16], sizes = [2, 8, 8], strides = [1, 1, 1]} : vector<2x8x32xf32> to vector<2x8x8xf32>
    %66 = arith.truncf %65 : vector<2x8x8xf32> to vector<2x8x8xbf16>
    %67 = vector.extract_strided_slice %12 {offsets = [0, 0, 16], sizes = [2, 8, 8], strides = [1, 1, 1]} : vector<2x8x32xf32> to vector<2x8x8xf32>
    %68 = arith.truncf %67 : vector<2x8x8xf32> to vector<2x8x8xbf16>
    "tpu.trace_start"() <{level = 10 : i32, message = "bld,bmd->blm"}> : () -> ()
    %cst_18 = arith.constant dense<0.000000e+00> : vector<2x8x8xf32>
    %69 = tpu.matmul %64, %66, %cst_18 {dimension_numbers = #tpu.dot_dimension_numbers<[2], [2], [1], [1], [0, 0, 0, 1, 1, 1], [0], [0]>} : vector<2x8x8xbf16>, vector<2x8x8xbf16>, vector<2x8x8xf32> -> vector<2x8x8xf32>
    "tpu.trace_stop"() : () -> ()
    %cst_19 = arith.constant dense<0xFF800000> : vector<2x8xf32>
    %70 = vector.multi_reduction <maximumf>, %69, %cst_19 [2] : vector<2x8x8xf32> to vector<2x8xf32>
    %71 = vector.shape_cast %70 : vector<2x8xf32> to vector<2x8x1xf32>
    %72 = vector.broadcast %71 : vector<2x8x1xf32> to vector<2x8x8xf32>
    %73 = arith.subf %69, %72 : vector<2x8x8xf32>
    %74 = math.exp %73 : vector<2x8x8xf32>
    %cst_20 = arith.constant dense<0.000000e+00> : vector<2x8xf32>
    %75 = vector.multi_reduction <add>, %74, %cst_20 [2] : vector<2x8x8xf32> to vector<2x8xf32>
    %76 = vector.shape_cast %75 : vector<2x8xf32> to vector<2x8x1xf32>
    %77 = tpu.reciprocal %76 {approx = true} : vector<2x8x1xf32> -> vector<2x8x1xf32>
    %78 = vector.broadcast %77 : vector<2x8x1xf32> to vector<2x8x8xf32>
    %79 = arith.mulf %74, %78 : vector<2x8x8xf32>
    %80 = arith.truncf %79 : vector<2x8x8xf32> to vector<2x8x8xbf16>
    "tpu.trace_start"() <{level = 10 : i32, message = "blm,bmd->bld"}> : () -> ()
    %cst_21 = arith.constant dense<0.000000e+00> : vector<2x8x8xf32>
    %81 = tpu.matmul %80, %68, %cst_21 {dimension_numbers = #tpu.dot_dimension_numbers<[2], [1], [1], [2], [0, 0, 0, 1, 1, 2], [0], [0]>} : vector<2x8x8xbf16>, vector<2x8x8xbf16>, vector<2x8x8xf32> -> vector<2x8x8xf32>
    "tpu.trace_stop"() : () -> ()
    %82 = vector.shape_cast %81 : vector<2x8x8xf32> to vector<16x8xf32>
    %83 = arith.truncf %82 : vector<16x8xf32> to vector<16x8xbf16>
    %84 = vector.extract_strided_slice %13 {offsets = [16, 0], sizes = [8, 32], strides = [1, 1]} : vector<32x32xbf16> to vector<8x32xbf16>
    %cst_22 = arith.constant dense<0.000000e+00> : vector<16x32xf32>
    %85 = tpu.matmul %83, %84, %cst_22 {dimension_numbers = #tpu.dot_dimension_numbers<[1], [0], [0], [1], [0, 0, 1, 1], [], []>} : vector<16x8xbf16>, vector<8x32xbf16>, vector<16x32xf32> -> vector<16x32xf32>
    %86 = arith.addf %62, %85 : vector<16x32xf32>
    %87 = vector.extract_strided_slice %8 {offsets = [0, 0, 24], sizes = [2, 8, 8], strides = [1, 1, 1]} : vector<2x8x32xf32> to vector<2x8x8xf32>
    %88 = arith.truncf %87 : vector<2x8x8xf32> to vector<2x8x8xbf16>
    %89 = vector.extract_strided_slice %10 {offsets = [0, 0, 24], sizes = [2, 8, 8], strides = [1, 1, 1]} : vector<2x8x32xf32> to vector<2x8x8xf32>
    %90 = arith.truncf %89 : vector<2x8x8xf32> to vector<2x8x8xbf16>
    %91 = vector.extract_strided_slice %12 {offsets = [0, 0, 24], sizes = [2, 8, 8], strides = [1, 1, 1]} : vector<2x8x32xf32> to vector<2x8x8xf32>
    %92 = arith.truncf %91 : vector<2x8x8xf32> to vector<2x8x8xbf16>
    "tpu.trace_start"() <{level = 10 : i32, message = "bld,bmd->blm"}> : () -> ()
    %cst_23 = arith.constant dense<0.000000e+00> : vector<2x8x8xf32>
    %93 = tpu.matmul %88, %90, %cst_23 {dimension_numbers = #tpu.dot_dimension_numbers<[2], [2], [1], [1], [0, 0, 0, 1, 1, 1], [0], [0]>} : vector<2x8x8xbf16>, vector<2x8x8xbf16>, vector<2x8x8xf32> -> vector<2x8x8xf32>
    "tpu.trace_stop"() : () -> ()
    %cst_24 = arith.constant dense<0xFF800000> : vector<2x8xf32>
    %94 = vector.multi_reduction <maximumf>, %93, %cst_24 [2] : vector<2x8x8xf32> to vector<2x8xf32>
    %95 = vector.shape_cast %94 : vector<2x8xf32> to vector<2x8x1xf32>
    %96 = vector.broadcast %95 : vector<2x8x1xf32> to vector<2x8x8xf32>
    %97 = arith.subf %93, %96 : vector<2x8x8xf32>
    %98 = math.exp %97 : vector<2x8x8xf32>
    %cst_25 = arith.constant dense<0.000000e+00> : vector<2x8xf32>
    %99 = vector.multi_reduction <add>, %98, %cst_25 [2] : vector<2x8x8xf32> to vector<2x8xf32>
    %100 = vector.shape_cast %99 : vector<2x8xf32> to vector<2x8x1xf32>
    %101 = tpu.reciprocal %100 {approx = true} : vector<2x8x1xf32> -> vector<2x8x1xf32>
    %102 = vector.broadcast %101 : vector<2x8x1xf32> to vector<2x8x8xf32>
    %103 = arith.mulf %98, %102 : vector<2x8x8xf32>
    %104 = arith.truncf %103 : vector<2x8x8xf32> to vector<2x8x8xbf16>
    "tpu.trace_start"() <{level = 10 : i32, message = "blm,bmd->bld"}> : () -> ()
    %cst_26 = arith.constant dense<0.000000e+00> : vector<2x8x8xf32>
    %105 = tpu.matmul %104, %92, %cst_26 {dimension_numbers = #tpu.dot_dimension_numbers<[2], [1], [1], [2], [0, 0, 0, 1, 1, 2], [0], [0]>} : vector<2x8x8xbf16>, vector<2x8x8xbf16>, vector<2x8x8xf32> -> vector<2x8x8xf32>
    "tpu.trace_stop"() : () -> ()
    %106 = vector.shape_cast %105 : vector<2x8x8xf32> to vector<16x8xf32>
    %107 = arith.truncf %106 : vector<16x8xf32> to vector<16x8xbf16>
    %108 = vector.extract_strided_slice %13 {offsets = [24, 0], sizes = [8, 32], strides = [1, 1]} : vector<32x32xbf16> to vector<8x32xbf16>
    %cst_27 = arith.constant dense<0.000000e+00> : vector<16x32xf32>
    %109 = tpu.matmul %107, %108, %cst_27 {dimension_numbers = #tpu.dot_dimension_numbers<[1], [0], [0], [1], [0, 0, 1, 1], [], []>} : vector<16x8xbf16>, vector<8x32xbf16>, vector<16x32xf32> -> vector<16x32xf32>
    %110 = arith.addf %86, %109 : vector<16x32xf32>
    %c0_28 = arith.constant 0 : index
    %c0_29 = arith.constant 0 : index
    %111 = vector.load %arg5[%c0_28, %c0_29] : memref<1x32xf32, #tpu.memory_space<vmem>>, vector<1x32xf32>
    %112 = vector.broadcast %111 : vector<1x32xf32> to vector<16x32xf32>
    %113 = arith.addf %110, %112 : vector<16x32xf32>
    %114 = arith.addf %0, %113 : vector<16x32xf32>
    %cst_30 = arith.constant dense<0.000000e+00> : vector<16xf32>
    %115 = vector.multi_reduction <add>, %114, %cst_30 [1] : vector<16x32xf32> to vector<16xf32>
    %116 = vector.shape_cast %115 : vector<16xf32> to vector<16x1xf32>
    %cst_31 = arith.constant 3.200000e+01 : f32
    %117 = vector.broadcast %cst_31 : f32 to vector<16x1xf32>
    %118 = arith.divf %116, %117 : vector<16x1xf32>
    %119 = vector.broadcast %118 : vector<16x1xf32> to vector<16x32xf32>
    %120 = arith.subf %114, %119 : vector<16x32xf32>
    %121 = arith.mulf %120, %120 : vector<16x32xf32>
    %cst_32 = arith.constant dense<0.000000e+00> : vector<16xf32>
    %122 = vector.multi_reduction <add>, %121, %cst_32 [1] : vector<16x32xf32> to vector<16xf32>
    %123 = vector.shape_cast %122 : vector<16xf32> to vector<16x1xf32>
    %cst_33 = arith.constant 3.200000e+01 : f32
    %124 = vector.broadcast %cst_33 : f32 to vector<16x1xf32>
    %125 = arith.divf %123, %124 : vector<16x1xf32>
    %126 = vector.broadcast %118 : vector<16x1xf32> to vector<16x32xf32>
    %127 = arith.subf %114, %126 : vector<16x32xf32>
    %cst_34 = arith.constant 9.99999974E-6 : f32
    %128 = vector.broadcast %cst_34 : f32 to vector<16x1xf32>
    %129 = arith.addf %125, %128 : vector<16x1xf32>
    %130 = math.rsqrt %129 : vector<16x1xf32>
    %131 = vector.broadcast %130 : vector<16x1xf32> to vector<16x32xf32>
    %132 = arith.mulf %127, %131 : vector<16x32xf32>
    %c0_35 = arith.constant 0 : index
    %c0_36 = arith.constant 0 : index
    %133 = vector.load %arg10[%c0_35, %c0_36] : memref<1x32xf32, #tpu.memory_space<vmem>>, vector<1x32xf32>
    %134 = vector.broadcast %133 : vector<1x32xf32> to vector<16x32xf32>
    %135 = arith.mulf %132, %134 : vector<16x32xf32>
    %c0_37 = arith.constant 0 : index
    %c0_38 = arith.constant 0 : index
    %136 = vector.load %arg11[%c0_37, %c0_38] : memref<1x32xf32, #tpu.memory_space<vmem>>, vector<1x32xf32>
    %137 = vector.broadcast %136 : vector<1x32xf32> to vector<16x32xf32>
    %138 = arith.addf %135, %137 : vector<16x32xf32>
    %139 = arith.truncf %138 : vector<16x32xf32> to vector<16x32xbf16>
    %c0_39 = arith.constant 0 : index
    %c0_40 = arith.constant 0 : index
    %140 = vector.load %arg6[%c0_39, %c0_40] : memref<32x64xbf16, #tpu.memory_space<vmem>>, vector<32x64xbf16>
    %cst_41 = arith.constant dense<0.000000e+00> : vector<16x64xf32>
    %141 = tpu.matmul %139, %140, %cst_41 {dimension_numbers = #tpu.dot_dimension_numbers<[1], [0], [0], [1], [0, 0, 1, 1], [], []>} : vector<16x32xbf16>, vector<32x64xbf16>, vector<16x64xf32> -> vector<16x64xf32>
    %c0_42 = arith.constant 0 : index
    %c0_43 = arith.constant 0 : index
    %142 = vector.load %arg7[%c0_42, %c0_43] : memref<1x64xf32, #tpu.memory_space<vmem>>, vector<1x64xf32>
    %143 = vector.broadcast %142 : vector<1x64xf32> to vector<16x64xf32>
    %144 = arith.addf %141, %143 : vector<16x64xf32>
    %cst_44 = arith.constant 0.000000e+00 : f32
    %145 = vector.broadcast %cst_44 : f32 to vector<16x64xf32>
    %146 = arith.maximumf %144, %145 : vector<16x64xf32>
    %147 = arith.truncf %146 : vector<16x64xf32> to vector<16x64xbf16>
    %c0_45 = arith.constant 0 : index
    %c0_46 = arith.constant 0 : index
    %148 = vector.load %arg8[%c0_45, %c0_46] : memref<64x32xbf16, #tpu.memory_space<vmem>>, vector<64x32xbf16>
    %cst_47 = arith.constant dense<0.000000e+00> : vector<16x32xf32>
    %149 = tpu.matmul %147, %148, %cst_47 {dimension_numbers = #tpu.dot_dimension_numbers<[1], [0], [0], [1], [0, 0, 1, 1], [], []>} : vector<16x64xbf16>, vector<64x32xbf16>, vector<16x32xf32> -> vector<16x32xf32>
    %c0_48 = arith.constant 0 : index
    %c0_49 = arith.constant 0 : index
    %150 = vector.load %arg9[%c0_48, %c0_49] : memref<1x32xf32, #tpu.memory_space<vmem>>, vector<1x32xf32>
    %151 = vector.broadcast %150 : vector<1x32xf32> to vector<16x32xf32>
    %152 = arith.addf %149, %151 : vector<16x32xf32>
    %153 = arith.addf %138, %152 : vector<16x32xf32>
    %cst_50 = arith.constant dense<0.000000e+00> : vector<16xf32>
    %154 = vector.multi_reduction <add>, %153, %cst_50 [1] : vector<16x32xf32> to vector<16xf32>
    %155 = vector.shape_cast %154 : vector<16xf32> to vector<16x1xf32>
    %cst_51 = arith.constant 3.200000e+01 : f32
    %156 = vector.broadcast %cst_51 : f32 to vector<16x1xf32>
    %157 = arith.divf %155, %156 : vector<16x1xf32>
    %158 = vector.broadcast %157 : vector<16x1xf32> to vector<16x32xf32>
    %159 = arith.subf %153, %158 : vector<16x32xf32>
    %160 = arith.mulf %159, %159 : vector<16x32xf32>
    %cst_52 = arith.constant dense<0.000000e+00> : vector<16xf32>
    %161 = vector.multi_reduction <add>, %160, %cst_52 [1] : vector<16x32xf32> to vector<16xf32>
    %162 = vector.shape_cast %161 : vector<16xf32> to vector<16x1xf32>
    %cst_53 = arith.constant 3.200000e+01 : f32
    %163 = vector.broadcast %cst_53 : f32 to vector<16x1xf32>
    %164 = arith.divf %162, %163 : vector<16x1xf32>
    %165 = vector.broadcast %157 : vector<16x1xf32> to vector<16x32xf32>
    %166 = arith.subf %153, %165 : vector<16x32xf32>
    %cst_54 = arith.constant 9.99999974E-6 : f32
    %167 = vector.broadcast %cst_54 : f32 to vector<16x1xf32>
    %168 = arith.addf %164, %167 : vector<16x1xf32>
    %169 = math.rsqrt %168 : vector<16x1xf32>
    %170 = vector.broadcast %169 : vector<16x1xf32> to vector<16x32xf32>
    %171 = arith.mulf %166, %170 : vector<16x32xf32>
    %c0_55 = arith.constant 0 : index
    %c0_56 = arith.constant 0 : index
    %172 = vector.load %arg12[%c0_55, %c0_56] : memref<1x32xf32, #tpu.memory_space<vmem>>, vector<1x32xf32>
    %173 = vector.broadcast %172 : vector<1x32xf32> to vector<16x32xf32>
    %174 = arith.mulf %171, %173 : vector<16x32xf32>
    %c0_57 = arith.constant 0 : index
    %c0_58 = arith.constant 0 : index
    %175 = vector.load %arg13[%c0_57, %c0_58] : memref<1x32xf32, #tpu.memory_space<vmem>>, vector<1x32xf32>
    %176 = vector.broadcast %175 : vector<1x32xf32> to vector<16x32xf32>
    %177 = arith.addf %174, %176 : vector<16x32xf32>
    %c0_59 = arith.constant 0 : index
    %c0_60 = arith.constant 0 : index
    %178 = vector.load %arg14[%c0_59, %c0_60] : memref<16x32xf32, #tpu.memory_space<vmem>>, vector<16x32xf32>
    tpu.vector_store %arg14[%c0_59, %c0_60], %177 {strides = array<i32>} : memref<16x32xf32, #tpu.memory_space<vmem>>, vector<16x32xf32>,
    return
  }
  func.func @transform_0(%arg0: i32) -> (i32, i32) {
    %c0_i32 = arith.constant 0 : i32
    %c0_i32_0 = arith.constant 0 : i32
    return %arg0, %c0_i32 : i32, i32
  }
  func.func @transform_1(%arg0: i32) -> (i32, i32) {
    %c0_i32 = arith.constant 0 : i32
    %c0_i32_0 = arith.constant 0 : i32
    %c0_i32_1 = arith.constant 0 : i32
    return %c0_i32, %c0_i32_0 : i32, i32
  }
  func.func @transform_2(%arg0: i32) -> (i32, i32) {
    %c0_i32 = arith.constant 0 : i32
    %c0_i32_0 = arith.constant 0 : i32
    %c0_i32_1 = arith.constant 0 : i32
    return %c0_i32, %c0_i32_0 : i32, i32
  }
  func.func @transform_3(%arg0: i32) -> (i32, i32) {
    %c0_i32 = arith.constant 0 : i32
    %c0_i32_0 = arith.constant 0 : i32
    %c0_i32_1 = arith.constant 0 : i32
    return %c0_i32, %c0_i32_0 : i32, i32
  }
  func.func @transform_4(%arg0: i32) -> (i32, i32) {
    %c0_i32 = arith.constant 0 : i32
    %c0_i32_0 = arith.constant 0 : i32
    %c0_i32_1 = arith.constant 0 : i32
    return %c0_i32, %c0_i32_0 : i32, i32
  }
  func.func @transform_5(%arg0: i32) -> (i32, i32) {
    %c0_i32 = arith.constant 0 : i32
    %c0_i32_0 = arith.constant 0 : i32
    %c0_i32_1 = arith.constant 0 : i32
    return %c0_i32, %c0_i32_0 : i32, i32
  }
  func.func @transform_6(%arg0: i32) -> (i32, i32) {
    %c0_i32 = arith.constant 0 : i32
    %c0_i32_0 = arith.constant 0 : i32
    %c0_i32_1 = arith.constant 0 : i32
    return %c0_i32, %c0_i32_0 : i32, i32
  }
  func.func @transform_7(%arg0: i32) -> (i32, i32) {
    %c0_i32 = arith.constant 0 : i32
    %c0_i32_0 = arith.constant 0 : i32
    %c0_i32_1 = arith.constant 0 : i32
    return %c0_i32, %c0_i32_0 : i32, i32
  }
  func.func @transform_8(%arg0: i32) -> (i32, i32) {
    %c0_i32 = arith.constant 0 : i32
    %c0_i32_0 = arith.constant 0 : i32
    %c0_i32_1 = arith.constant 0 : i32
    return %c0_i32, %c0_i32_0 : i32, i32
  }
  func.func @transform_9(%arg0: i32) -> (i32, i32) {
    %c0_i32 = arith.constant 0 : i32
    %c0_i32_0 = arith.constant 0 : i32
    %c0_i32_1 = arith.constant 0 : i32
    return %c0_i32, %c0_i32_0 : i32, i32
  }
  func.func @transform_10(%arg0: i32) -> (i32, i32) {
    %c0_i32 = arith.constant 0 : i32
    %c0_i32_0 = arith.constant 0 : i32
    %c0_i32_1 = arith.constant 0 : i32
    return %c0_i32, %c0_i32_0 : i32, i32
  }
  func.func @transform_11(%arg0: i32) -> (i32, i32) {
    %c0_i32 = arith.constant 0 : i32
    %c0_i32_0 = arith.constant 0 : i32
    %c0_i32_1 = arith.constant 0 : i32
    return %c0_i32, %c0_i32_0 : i32, i32
  }
  func.func @transform_12(%arg0: i32) -> (i32, i32) {
    %c0_i32 = arith.constant 0 : i32
    %c0_i32_0 = arith.constant 0 : i32
    %c0_i32_1 = arith.constant 0 : i32
    return %c0_i32, %c0_i32_0 : i32, i32
  }
  func.func @transform_13(%arg0: i32) -> (i32, i32) {
    %c0_i32 = arith.constant 0 : i32
    %c0_i32_0 = arith.constant 0 : i32
    return %arg0, %c0_i32 : i32, i32
  }
}

</mosaic_0001>

<llo_original>
// kernel: tpu_custom_call.1
$region0: #{tpu_custom_call.1}
  #allocation0 [shape = 'u32[]', space=smem, size = 0x4, offset = 0x4, fixed_abs, tag = 'smem constant byte address 0x4 - core index']
  #allocation1 [shape = 'u32[144,128]{1,0:T(1,128)}', space=vmem, size = 0x12000, scoped, tag = 'internal scratch']
  %s0 = inlined_call_operand.vmem [shape: f32[16,32], index: 0, kind: input, shape index: {}]
  %s1 = inlined_call_operand.vmem [shape: bf16[32,96], index: 1, kind: input, shape index: {}]
  %s2 = inlined_call_operand.vmem [shape: f32[1,96], index: 2, kind: input, shape index: {}]
  %s3 = inlined_call_operand.vmem [shape: bf16[32,32], index: 3, kind: input, shape index: {}]
  %s4 = inlined_call_operand.vmem [shape: f32[1,32], index: 4, kind: input, shape index: {}]
  %s5 = inlined_call_operand.hbm [shape: bf16[32,64], index: 5, kind: input, shape index: {}]
  %s6 = inlined_call_operand.vmem [shape: f32[1,64], index: 6, kind: input, shape index: {}]
  %s7 = inlined_call_operand.vmem [shape: bf16[64,32], index: 7, kind: input, shape index: {}]
  %s8 = inlined_call_operand.vmem [shape: f32[1,32], index: 8, kind: input, shape index: {}]
  %s9 = inlined_call_operand.vmem [shape: f32[1,32], index: 9, kind: input, shape index: {}]
  %s10 = inlined_call_operand.vmem [shape: f32[1,32], index: 10, kind: input, shape index: {}]
  %s11 = inlined_call_operand.vmem [shape: f32[1,32], index: 11, kind: input, shape index: {}]
  %s12 = inlined_call_operand.vmem [shape: f32[1,32], index: 12, kind: input, shape index: {}]
  %s13 = inlined_call_operand.hbm [shape: f32[16,32], index: 13, kind: output, shape index: {}]
  %s14 = sld [smem:[#allocation0]]
  $region66: #{tpu_custom_call.1} parent=0
    _
  %s16 = ssub.s32 1, %s14
  %s17 = scalar_select 0, %s16, %s14
  $region1: #{tpu_custom_call.1} parent=0
    #allocation2 [shape = 'u8[8192]{0}', space=vmem, size = 0x2000, scoped, tag = 'input window, operand 5, single buffered']
    #allocation3 [shape = 's32[1]{0}', space=sflag, size = 0x4, scoped, tag = 'scoped memory for tpu_custom_call.1']
    #allocation4 [shape = 's32[1]{0}', space=sflag, size = 0x4, scoped, tag = 'scoped memory for tpu_custom_call.1']
    #allocation5 [shape = 'u8[8192]{0}', space=vmem, size = 0x2000, scoped, tag = 'output window, operand 0, single buffered']
    %18 = vsyncpa [#allocation3], 0
    %19 = vsyncpa [#allocation4], 0
    // Predicated region
    $region2: #{tpu_custom_call.1} parent=1 // pred_check
      _
    $region3: #{tpu_custom_call.1} parent=1 // pred_check_branch
      %21 = sbr.rel (0) target = $region5
    $region4: #{tpu_custom_call.1} parent=1 // pred_region
      _
    $region5: #{tpu_custom_call.1} parent=1 // pred_fallthru
      _
    // Predicated region
    $region6: #{tpu_custom_call.1} parent=1 // pred_check
      _
    $region7: #{tpu_custom_call.1} parent=1 // pred_check_branch
      %23 = sbr.rel (0) target = $region9
    $region8: #{tpu_custom_call.1} parent=1 // pred_region
      _
    $region9: #{tpu_custom_call.1} parent=1 // pred_fallthru
      _
    // Predicated region
    $region10: #{tpu_custom_call.1} parent=1 // pred_check
      _
    $region11: #{tpu_custom_call.1} parent=1 // pred_check_branch
      %25 = sbr.rel (0) target = $region13
    $region12: #{tpu_custom_call.1} parent=1 // pred_region
      _
    $region13: #{tpu_custom_call.1} parent=1 // pred_fallthru
      _
    // Predicated region
    $region14: #{tpu_custom_call.1} parent=1 // pred_check
      _
    $region15: #{tpu_custom_call.1} parent=1 // pred_check_branch
      %27 = sbr.rel (0) target = $region17
    $region16: #{tpu_custom_call.1} parent=1 // pred_region
      _
    $region17: #{tpu_custom_call.1} parent=1 // pred_fallthru
      _
    // Predicated region
    $region18: #{tpu_custom_call.1} parent=1 // pred_check
      _
    $region19: #{tpu_custom_call.1} parent=1 // pred_check_branch
      %29 = sbr.rel (0) target = $region21
    $region20: #{tpu_custom_call.1} parent=1 // pred_region
      _
    $region21: #{tpu_custom_call.1} parent=1 // pred_fallthru
      _
    // Predicated region
    $region22: #{tpu_custom_call.1} parent=1 // pred_check
      _
    $region23: #{tpu_custom_call.1} parent=1 // pred_check_branch
      %31 = sbr.rel (0) target = $region25
    $region24: #{tpu_custom_call.1} parent=1 // pred_region
      %s33 = ssub.s32 256, 256
      %34 = vsyncadd [#allocation3], %s33
      %s35 = sshll.u32 [#allocation2], 4
      %s36 = int_to_ptr.vmem [resolvable:$true] %s35
      %41 = dma.hbm_to_vmem [thread:$0]  %s5, 256, %s36, [#allocation3], 64, 64, 4
    $region25: #{tpu_custom_call.1} parent=1 // pred_fallthru
      _
    // Predicated region
    $region26: #{tpu_custom_call.1} parent=1 // pred_check
      _
    $region27: #{tpu_custom_call.1} parent=1 // pred_check_branch
      %43 = sbr.rel (0) target = $region29
    $region28: #{tpu_custom_call.1} parent=1 // pred_region
      _
    $region29: #{tpu_custom_call.1} parent=1 // pred_fallthru
      _
    // Predicated region
    $region30: #{tpu_custom_call.1} parent=1 // pred_check
      _
    $region31: #{tpu_custom_call.1} parent=1 // pred_check_branch
      %45 = sbr.rel (0) target = $region33
    $region32: #{tpu_custom_call.1} parent=1 // pred_region
      _
    $region33: #{tpu_custom_call.1} parent=1 // pred_fallthru
      _
    // Predicated region
    $region34: #{tpu_custom_call.1} parent=1 // pred_check
      _
    $region35: #{tpu_custom_call.1} parent=1 // pred_check_branch
      %47 = sbr.rel (0) target = $region37
    $region36: #{tpu_custom_call.1} parent=1 // pred_region
      _
    $region37: #{tpu_custom_call.1} parent=1 // pred_fallthru
      _
    // Predicated region
    $region38: #{tpu_custom_call.1} parent=1 // pred_check
      _
    $region39: #{tpu_custom_call.1} parent=1 // pred_check_branch
      %49 = sbr.rel (0) target = $region41
    $region40: #{tpu_custom_call.1} parent=1 // pred_region
      _
    $region41: #{tpu_custom_call.1} parent=1 // pred_fallthru
      _
    // Predicated region
    $region42: #{tpu_custom_call.1} parent=1 // pred_check
      _
    $region43: #{tpu_custom_call.1} parent=1 // pred_check_branch
      %51 = sbr.rel (0) target = $region45
    $region44: #{tpu_custom_call.1} parent=1 // pred_region
      _
    $region45: #{tpu_custom_call.1} parent=1 // pred_fallthru
      _
    // Predicated region
    $region46: #{tpu_custom_call.1} parent=1 // pred_check
      _
    $region47: #{tpu_custom_call.1} parent=1 // pred_check_branch
      %53 = sbr.rel (0) target = $region49
    $region48: #{tpu_custom_call.1} parent=1 // pred_region
      _
    $region49: #{tpu_custom_call.1} parent=1 // pred_fallthru
      _
    // Predicated region
    $region50: #{tpu_custom_call.1} parent=1 // pred_check
      _
    $region51: #{tpu_custom_call.1} parent=1 // pred_check_branch
      %55 = sbr.rel (0) target = $region53
    $region52: #{tpu_custom_call.1} parent=1 // pred_region
      _
    $region53: #{tpu_custom_call.1} parent=1 // pred_fallthru
      _
    // Predicated region
    $region54: #{tpu_custom_call.1} parent=1 // pred_check
      _
    $region55: #{tpu_custom_call.1} parent=1 // pred_check_branch
      %57 = sbr.rel (0) target = $region57
    $region56: #{tpu_custom_call.1} parent=1 // pred_region
      %58 = dma.done [#allocation3], 256
    $region57: #{tpu_custom_call.1} parent=1 // pred_fallthru
      _
    %v60 = vld [vmem:[%s0] sm:$0xff]
    %v61 = vld [vmem:[%s0 + $0x8] sm:$0xff]
    %v62 = vpack.c.bf16 %v61, %v60
    %v63 = vld [vmem:[%s1] sm:$0xf]
    %v64 = vld [vmem:[%s1 + $0x4] sm:$0xf]
    %v65 = vld [vmem:[%s1 + $0x8] sm:$0xf]
    %v66 = vld [vmem:[%s1 + $0xc] sm:$0xf]
    %v67 = vld [vmem:[%s2] sm:$0x1]
    %v69 = vlaneseq
    %v70 = vshrl.u32 %v69, 7
    %v71 = vsub.s32 0, %v70
    %v72 = vrot.slane %v67, %v71
    %v78 = vunpack.c.l.b16 %v63
    %v79 = vunpack.c.l.b16 %v64
    %v80 = vunpack.c.l.b16 %v65
    %v81 = vunpack.c.l.b16 %v66
    %v82 = vpack.c.b16 %v79, %v78
    %v83 = vpack.c.b16 %v81, %v80
    %vm86 = vcmask 261120
    %v88 = vsel %vm86, %v62, 0
    %90 = vmatprep.subr.bf16.mxu0 0
    %91 = vmatpush1.bf16.msra.mxu0 0
    %92 = vmatprep.subr.bf16.mxu0 0
    %93 = vmatpush1.bf16.msra.mxu0 0
    %94 = vmatprep.subr.bf16.mxu0 0
    %95 = vmatpush1.bf16.msra.mxu0 0
    %96 = vmatprep.subr.bf16.mxu0 0
    %97 = vmatpush1.bf16.msra.mxu0 0
    %98 = vmatprep.subr.bf16.mxu0 0
    %99 = vmatpush1.bf16.msra.mxu0 0
    %100 = vmatprep.subr.bf16.mxu0 0
    %101 = vmatpush1.bf16.msra.mxu0 0
    %102 = vmatprep.subr.bf16.mxu0 0
    %103 = vmatpush1.bf16.msra.mxu0 %v83
    %104 = vmatprep.subr.bf16.mxu0 0
    %105 = vmatpush1.bf16.msra.mxu0 %v82
    %106 = vmatprep.subr.bf16.mxu0 0
    %107 = vmatpush2.bf16.msra.mxu0 0
    %108 = vmatprep.subr.bf16.mxu0 0
    %109 = vmatpush2.bf16.msra.mxu0 0
    %110 = vmatprep.subr.bf16.mxu0 0
    %111 = vmatpush2.bf16.msra.mxu0 0
    %112 = vmatprep.subr.bf16.mxu0 0
    %113 = vmatpush2.bf16.msra.mxu0 0
    %114 = vmatprep.subr.bf16.mxu0 0
    %115 = vmatpush2.bf16.msra.mxu0 0
    %116 = vmatprep.subr.bf16.mxu0 0
    %117 = vmatpush2.bf16.msra.mxu0 0
    %118 = vmatprep.subr.bf16.mxu0 0
    %119 = vmatpush2.bf16.msra.mxu0 0
    %120 = vmatprep.subr.bf16.mxu0 0
    %121 = vmatpush2.bf16.msra.mxu0 0
    %122 = vmatprep.mubr.bf16.mxu0 0
    %123 = vmatmul.mubr.bf16.gmra.mxu0 %v88
    %v124 = vpop.f32.mrf.mxu0
    %v125 = vadd.f32 %v72, %v124
    %v126 = vpop.f32.mrf.mxu0
    %v127 = vpop.f32.mrf.mxu0
    %v128 = vadd.f32 %v72, %v127
    %v129 = vpop.f32.mrf.mxu0
    %130 = vdwg.mxu0
    %v131 = vld [vmem:[%s3] sm:$0xf]
    %v132 = vld [vmem:[%s3 + $0x4] sm:$0xf]
    %v133 = vld [vmem:[%s3 + $0x8] sm:$0xf]
    %v134 = vld [vmem:[%s3 + $0xc] sm:$0xf]
    %v135 = vpack.c.bf16 %v125, %v125
    %v136 = vpack.c.bf16 %v128, %v128
    %138 = vrot.lane.b32.xlu0 %v135, 96
    %v139 = vpop.permute.xlu0 %138
    %vm140 = vcmask 64512
    %v142 = vsel %vm140, %v135, 0
    %v145 = vsel %vm140, %v139, 0
    %147 = vmatprep.subr.bf16.mxu0 0
    %148 = vmatpush1.bf16.xpose.msra.mxu0 0
    %149 = vmatprep.subr.bf16.mxu0 0
    %150 = vmatpush1.bf16.xpose.msra.mxu0 0
    %151 = vmatprep.subr.bf16.mxu0 0
    %152 = vmatpush1.bf16.xpose.msra.mxu0 0
    %153 = vmatprep.subr.bf16.mxu0 0
    %154 = vmatpush1.bf16.xpose.msra.mxu0 0
    %155 = vmatprep.subr.bf16.mxu0 0
    %156 = vmatpush1.bf16.xpose.msra.mxu0 0
    %157 = vmatprep.subr.bf16.mxu0 0
    %158 = vmatpush1.bf16.xpose.msra.mxu0 0
    %159 = vmatprep.subr.bf16.mxu0 0
    %160 = vmatpush1.bf16.xpose.msra.mxu0 0
    %161 = vmatprep.subr.bf16.mxu0 0
    %162 = vmatpush1.bf16.xpose.msra.mxu0 %v145
    %163 = vmatprep.subr.bf16.mxu0 0
    %164 = vmatpush2.bf16.xpose.msra.mxu0 0
    %165 = vmatprep.subr.bf16.mxu0 0
    %166 = vmatpush2.bf16.xpose.msra.mxu0 0
    %167 = vmatprep.subr.bf16.mxu0 0
    %168 = vmatpush2.bf16.xpose.msra.mxu0 0
    %169 = vmatprep.subr.bf16.mxu0 0
    %170 = vmatpush2.bf16.xpose.msra.mxu0 0
    %171 = vmatprep.subr.bf16.mxu0 0
    %172 = vmatpush2.bf16.xpose.msra.mxu0 0
    %173 = vmatprep.subr.bf16.mxu0 0
    %174 = vmatpush2.bf16.xpose.msra.mxu0 0
    %175 = vmatprep.subr.bf16.mxu0 0
    %176 = vmatpush2.bf16.xpose.msra.mxu0 0
    %177 = vmatprep.subr.bf16.mxu0 0
    %178 = vmatpush2.bf16.xpose.msra.mxu0 0
    %179 = vmatprep.mubr.bf16.mxu0 0
    %180 = vmatmul.mubr.bf16.gmra.mxu0 %v142
    %v181 = vpop.f32.mrf.mxu0
    %v182 = vadd.f32 0.0, %v181
    %v183 = vpop.f32.mrf.mxu0
    %v184 = vpop.f32.mrf.mxu0
    %v185 = vpop.f32.mrf.mxu0
    %186 = vdwg.mxu0
    %188 = vrot.lane.b32.xlu0 %v136, 96
    %v189 = vpop.permute.xlu0 %188
    %v191 = vsel %vm140, %v136, 0
    %v194 = vsel %vm140, %v189, 0
    %196 = vmatprep.subr.bf16.mxu0 0
    %197 = vmatpush1.bf16.xpose.msra.mxu0 0
    %198 = vmatprep.subr.bf16.mxu0 0
    %199 = vmatpush1.bf16.xpose.msra.mxu0 0
    %200 = vmatprep.subr.bf16.mxu0 0
    %201 = vmatpush1.bf16.xpose.msra.mxu0 0
    %202 = vmatprep.subr.bf16.mxu0 0
    %203 = vmatpush1.bf16.xpose.msra.mxu0 0
    %204 = vmatprep.subr.bf16.mxu0 0
    %205 = vmatpush1.bf16.xpose.msra.mxu0 0
    %206 = vmatprep.subr.bf16.mxu0 0
    %207 = vmatpush1.bf16.xpose.msra.mxu0 0
    %208 = vmatprep.subr.bf16.mxu0 0
    %209 = vmatpush1.bf16.xpose.msra.mxu0 0
    %210 = vmatprep.subr.bf16.mxu0 0
    %211 = vmatpush1.bf16.xpose.msra.mxu0 %v194
    %212 = vmatprep.subr.bf16.mxu0 0
    %213 = vmatpush2.bf16.xpose.msra.mxu0 0
    %214 = vmatprep.subr.bf16.mxu0 0
    %215 = vmatpush2.bf16.xpose.msra.mxu0 0
    %216 = vmatprep.subr.bf16.mxu0 0
    %217 = vmatpush2.bf16.xpose.msra.mxu0 0
    %218 = vmatprep.subr.bf16.mxu0 0
    %219 = vmatpush2.bf16.xpose.msra.mxu0 0
    %220 = vmatprep.subr.bf16.mxu0 0
    %221 = vmatpush2.bf16.xpose.msra.mxu0 0
    %222 = vmatprep.subr.bf16.mxu0 0
    %223 = vmatpush2.bf16.xpose.msra.mxu0 0
    %224 = vmatprep.subr.bf16.mxu0 0
    %225 = vmatpush2.bf16.xpose.msra.mxu0 0
    %226 = vmatprep.subr.bf16.mxu0 0
    %227 = vmatpush2.bf16.xpose.msra.mxu0 0
    %228 = vmatprep.mubr.bf16.mxu0 0
    %229 = vmatmul.mubr.bf16.gmra.mxu0 %v191
    %v230 = vpop.f32.mrf.mxu0
    %v231 = vadd.f32 0.0, %v230
    %v232 = vpop.f32.mrf.mxu0
    %v233 = vpop.f32.mrf.mxu0
    %v234 = vpop.f32.mrf.mxu0
    %235 = vdwg.mxu0
    %v236 = vsel %vm140, %v182, -inf
    %237 = vmax.xlane.f32.xlu0 %v236
    %v238 = vpop.xlane.xlu0 %237
    %v239 = vsel %vm140, %v231, -inf
    %240 = vmax.xlane.f32.xlu0 %v239
    %v241 = vpop.xlane.xlu0 %240
    %v242 = vsub.f32 %v182, %v238
    %v243 = vsub.f32 %v231, %v241
    %v244 = vmul.f32 %v242, 1.442695
    %v245 = vpow.pop %v244
    %v246 = vmul.f32 %v243, 1.442695
    %v247 = vpow.pop %v246
    %v248 = vsel %vm140, %v245, 0.0
    %249 = vadd.xlane.f32.xlu0 %v248
    %v250 = vpop.xlane.xlu0 %249
    %v251 = vsel %vm140, %v247, 0.0
    %252 = vadd.xlane.f32.xlu0 %v251
    %v253 = vpop.xlane.xlu0 %252
    %v254 = vrcp.pop %v250
    %v255 = vrcp.pop %v253
    %v256 = vmul.f32 %v245, %v254
    %v257 = vmul.f32 %v247, %v255
    %v258 = vpack.c.bf16 %v256, %v256
    %v259 = vpack.c.bf16 %v257, %v257
    %260 = vrot.lane.b32.xlu0 %v135, 64
    %v261 = vpop.permute.xlu0 %260
    %v263 = vsel %vm140, %v258, 0
    %vm265 = vcmask 1043456
    %v267 = vsel %vm265, %v261, 0
    %269 = vmatprep.subr.bf16.mxu0 0
    %270 = vmatpush1.bf16.msra.mxu0 0
    %271 = vmatprep.subr.bf16.mxu0 0
    %272 = vmatpush1.bf16.msra.mxu0 0
    %273 = vmatprep.subr.bf16.mxu0 0
    %274 = vmatpush1.bf16.msra.mxu0 0
    %275 = vmatprep.subr.bf16.mxu0 0
    %276 = vmatpush1.bf16.msra.mxu0 0
    %277 = vmatprep.subr.bf16.mxu0 0
    %278 = vmatpush1.bf16.msra.mxu0 0
    %279 = vmatprep.subr.bf16.mxu0 0
    %280 = vmatpush1.bf16.msra.mxu0 0
    %281 = vmatprep.subr.bf16.mxu0 0
    %282 = vmatpush1.bf16.msra.mxu0 0
    %283 = vmatprep.subr.bf16.mxu0 0
    %284 = vmatpush1.bf16.msra.mxu0 %v267
    %285 = vmatprep.subr.bf16.mxu0 0
    %286 = vmatpush2.bf16.msra.mxu0 0
    %287 = vmatprep.subr.bf16.mxu0 0
    %288 = vmatpush2.bf16.msra.mxu0 0
    %289 = vmatprep.subr.bf16.mxu0 0
    %290 = vmatpush2.bf16.msra.mxu0 0
    %291 = vmatprep.subr.bf16.mxu0 0
    %292 = vmatpush2.bf16.msra.mxu0 0
    %293 = vmatprep.subr.bf16.mxu0 0
    %294 = vmatpush2.bf16.msra.mxu0 0
    %295 = vmatprep.subr.bf16.mxu0 0
    %296 = vmatpush2.bf16.msra.mxu0 0
    %297 = vmatprep.subr.bf16.mxu0 0
    %298 = vmatpush2.bf16.msra.mxu0 0
    %299 = vmatprep.subr.bf16.mxu0 0
    %300 = vmatpush2.bf16.msra.mxu0 0
    %301 = vmatprep.mubr.bf16.mxu0 0
    %302 = vmatmul.mubr.bf16.gmra.mxu0 %v263
    %v303 = vpop.f32.mrf.mxu0
    %v304 = vadd.f32 0.0, %v303
    %v305 = vpop.f32.mrf.mxu0
    %v306 = vpop.f32.mrf.mxu0
    %v307 = vpop.f32.mrf.mxu0
    %308 = vdwg.mxu0
    %309 = vrot.lane.b32.xlu0 %v136, 64
    %v310 = vpop.permute.xlu0 %309
    %v312 = vsel %vm140, %v259, 0
    %v315 = vsel %vm265, %v310, 0
    %317 = vmatprep.subr.bf16.mxu0 0
    %318 = vmatpush1.bf16.msra.mxu0 0
    %319 = vmatprep.subr.bf16.mxu0 0
    %320 = vmatpush1.bf16.msra.mxu0 0
    %321 = vmatprep.subr.bf16.mxu0 0
    %322 = vmatpush1.bf16.msra.mxu0 0
    %323 = vmatprep.subr.bf16.mxu0 0
    %324 = vmatpush1.bf16.msra.mxu0 0
    %325 = vmatprep.subr.bf16.mxu0 0
    %326 = vmatpush1.bf16.msra.mxu0 0
    %327 = vmatprep.subr.bf16.mxu0 0
    %328 = vmatpush1.bf16.msra.mxu0 0
    %329 = vmatprep.subr.bf16.mxu0 0
    %330 = vmatpush1.bf16.msra.mxu0 0
    %331 = vmatprep.subr.bf16.mxu0 0
    %332 = vmatpush1.bf16.msra.mxu0 %v315
    %333 = vmatprep.subr.bf16.mxu0 0
    %334 = vmatpush2.bf16.msra.mxu0 0
    %335 = vmatprep.subr.bf16.mxu0 0
    %336 = vmatpush2.bf16.msra.mxu0 0
    %337 = vmatprep.subr.bf16.mxu0 0
    %338 = vmatpush2.bf16.msra.mxu0 0
    %339 = vmatprep.subr.bf16.mxu0 0
    %340 = vmatpush2.bf16.msra.mxu0 0
    %341 = vmatprep.subr.bf16.mxu0 0
    %342 = vmatpush2.bf16.msra.mxu0 0
    %343 = vmatprep.subr.bf16.mxu0 0
    %344 = vmatpush2.bf16.msra.mxu0 0
    %345 = vmatprep.subr.bf16.mxu0 0
    %346 = vmatpush2.bf16.msra.mxu0 0
    %347 = vmatprep.subr.bf16.mxu0 0
    %348 = vmatpush2.bf16.msra.mxu0 0
    %349 = vmatprep.mubr.bf16.mxu0 0
    %350 = vmatmul.mubr.bf16.gmra.mxu0 %v312
    %v351 = vpop.f32.mrf.mxu0
    %v352 = vadd.f32 0.0, %v351
    %v353 = vpop.f32.mrf.mxu0
    %v354 = vpop.f32.mrf.mxu0
    %v355 = vpop.f32.mrf.mxu0
    %356 = vdwg.mxu0
    %v357 = vpack.c.bf16 %v352, %v304
    %358 = vrot.lane.b32.xlu0 %v135, 120
    %v359 = vpop.permute.xlu0 %358
    %360 = vrot.lane.b32.xlu0 %v135, 88
    %v361 = vpop.permute.xlu0 %360
    %v363 = vsel %vm140, %v359, 0
    %v366 = vsel %vm140, %v361, 0
    %368 = vmatprep.subr.bf16.mxu0 0
    %369 = vmatpush1.bf16.xpose.msra.mxu0 0
    %370 = vmatprep.subr.bf16.mxu0 0
    %371 = vmatpush1.bf16.xpose.msra.mxu0 0
    %372 = vmatprep.subr.bf16.mxu0 0
    %373 = vmatpush1.bf16.xpose.msra.mxu0 0
    %374 = vmatprep.subr.bf16.mxu0 0
    %375 = vmatpush1.bf16.xpose.msra.mxu0 0
    %376 = vmatprep.subr.bf16.mxu0 0
    %377 = vmatpush1.bf16.xpose.msra.mxu0 0
    %378 = vmatprep.subr.bf16.mxu0 0
    %379 = vmatpush1.bf16.xpose.msra.mxu0 0
    %380 = vmatprep.subr.bf16.mxu0 0
    %381 = vmatpush1.bf16.xpose.msra.mxu0 0
    %382 = vmatprep.subr.bf16.mxu0 0
    %383 = vmatpush1.bf16.xpose.msra.mxu0 %v366
    %384 = vmatprep.subr.bf16.mxu0 0
    %385 = vmatpush2.bf16.xpose.msra.mxu0 0
    %386 = vmatprep.subr.bf16.mxu0 0
    %387 = vmatpush2.bf16.xpose.msra.mxu0 0
    %388 = vmatprep.subr.bf16.mxu0 0
    %389 = vmatpush2.bf16.xpose.msra.mxu0 0
    %390 = vmatprep.subr.bf16.mxu0 0
    %391 = vmatpush2.bf16.xpose.msra.mxu0 0
    %392 = vmatprep.subr.bf16.mxu0 0
    %393 = vmatpush2.bf16.xpose.msra.mxu0 0
    %394 = vmatprep.subr.bf16.mxu0 0
    %395 = vmatpush2.bf16.xpose.msra.mxu0 0
    %396 = vmatprep.subr.bf16.mxu0 0
    %397 = vmatpush2.bf16.xpose.msra.mxu0 0
    %398 = vmatprep.subr.bf16.mxu0 0
    %399 = vmatpush2.bf16.xpose.msra.mxu0 0
    %400 = vmatprep.mubr.bf16.mxu0 0
    %401 = vmatmul.mubr.bf16.gmra.mxu0 %v363
    %v402 = vpop.f32.mrf.mxu0
    %v403 = vadd.f32 0.0, %v402
    %v404 = vpop.f32.mrf.mxu0
    %v405 = vpop.f32.mrf.mxu0
    %v406 = vpop.f32.mrf.mxu0
    %407 = vdwg.mxu0
    %408 = vrot.lane.b32.xlu0 %v136, 120
    %v409 = vpop.permute.xlu0 %408
    %410 = vrot.lane.b32.xlu0 %v136, 88
    %v411 = vpop.permute.xlu0 %410
    %v413 = vsel %vm140, %v409, 0
    %v416 = vsel %vm140, %v411, 0
    %418 = vmatprep.subr.bf16.mxu0 0
    %419 = vmatpush1.bf16.xpose.msra.mxu0 0
    %420 = vmatprep.subr.bf16.mxu0 0
    %421 = vmatpush1.bf16.xpose.msra.mxu0 0
    %422 = vmatprep.subr.bf16.mxu0 0
    %423 = vmatpush1.bf16.xpose.msra.mxu0 0
    %424 = vmatprep.subr.bf16.mxu0 0
    %425 = vmatpush1.bf16.xpose.msra.mxu0 0
    %426 = vmatprep.subr.bf16.mxu0 0
    %427 = vmatpush1.bf16.xpose.msra.mxu0 0
    %428 = vmatprep.subr.bf16.mxu0 0
    %429 = vmatpush1.bf16.xpose.msra.mxu0 0
    %430 = vmatprep.subr.bf16.mxu0 0
    %431 = vmatpush1.bf16.xpose.msra.mxu0 0
    %432 = vmatprep.subr.bf16.mxu0 0
    %433 = vmatpush1.bf16.xpose.msra.mxu0 %v416
    %434 = vmatprep.subr.bf16.mxu0 0
    %435 = vmatpush2.bf16.xpose.msra.mxu0 0
    %436 = vmatprep.subr.bf16.mxu0 0
    %437 = vmatpush2.bf16.xpose.msra.mxu0 0
    %438 = vmatprep.subr.bf16.mxu0 0
    %439 = vmatpush2.bf16.xpose.msra.mxu0 0
    %440 = vmatprep.subr.bf16.mxu0 0
    %441 = vmatpush2.bf16.xpose.msra.mxu0 0
    %442 = vmatprep.subr.bf16.mxu0 0
    %443 = vmatpush2.bf16.xpose.msra.mxu0 0
    %444 = vmatprep.subr.bf16.mxu0 0
    %445 = vmatpush2.bf16.xpose.msra.mxu0 0
    %446 = vmatprep.subr.bf16.mxu0 0
    %447 = vmatpush2.bf16.xpose.msra.mxu0 0
    %448 = vmatprep.subr.bf16.mxu0 0
    %449 = vmatpush2.bf16.xpose.msra.mxu0 0
    %450 = vmatprep.mubr.bf16.mxu0 0
    %451 = vmatmul.mubr.bf16.gmra.mxu0 %v413
    %v452 = vpop.f32.mrf.mxu0
    %v453 = vadd.f32 0.0, %v452
    %v454 = vpop.f32.mrf.mxu0
    %v455 = vpop.f32.mrf.mxu0
    %v456 = vpop.f32.mrf.mxu0
    %457 = vdwg.mxu0
    %v458 = vsel %vm140, %v403, -inf
    %459 = vmax.xlane.f32.xlu0 %v458
    %v460 = vpop.xlane.xlu0 %459
    %v461 = vsel %vm140, %v453, -inf
    %462 = vmax.xlane.f32.xlu0 %v461
    %v463 = vpop.xlane.xlu0 %462
    %v464 = vsub.f32 %v403, %v460
    %v465 = vsub.f32 %v453, %v463
    %v466 = vmul.f32 %v464, 1.442695
    %v467 = vpow.pop %v466
    %v468 = vmul.f32 %v465, 1.442695
    %v469 = vpow.pop %v468
    %v470 = vsel %vm140, %v467, 0.0
    %471 = vadd.xlane.f32.xlu0 %v470
    %v472 = vpop.xlane.xlu0 %471
    %v473 = vsel %vm140, %v469, 0.0
    %474 = vadd.xlane.f32.xlu0 %v473
    %v475 = vpop.xlane.xlu0 %474
    %v476 = vrcp.pop %v472
    %v477 = vrcp.pop %v475
    %v478 = vmul.f32 %v467, %v476
    %v479 = vmul.f32 %v469, %v477
    %v480 = vpack.c.bf16 %v478, %v478
    %v481 = vpack.c.bf16 %v479, %v479
    %482 = vrot.lane.b32.xlu0 %v135, 56
    %v483 = vpop.permute.xlu0 %482
    %v485 = vsel %vm140, %v480, 0
    %v488 = vsel %vm265, %v483, 0
    %490 = vmatprep.subr.bf16.mxu0 0
    %491 = vmatpush1.bf16.msra.mxu0 0
    %492 = vmatprep.subr.bf16.mxu0 0
    %493 = vmatpush1.bf16.msra.mxu0 0
    %494 = vmatprep.subr.bf16.mxu0 0
    %495 = vmatpush1.bf16.msra.mxu0 0
    %496 = vmatprep.subr.bf16.mxu0 0
    %497 = vmatpush1.bf16.msra.mxu0 0
    %498 = vmatprep.subr.bf16.mxu0 0
    %499 = vmatpush1.bf16.msra.mxu0 0
    %500 = vmatprep.subr.bf16.mxu0 0
    %501 = vmatpush1.bf16.msra.mxu0 0
    %502 = vmatprep.subr.bf16.mxu0 0
    %503 = vmatpush1.bf16.msra.mxu0 0
    %504 = vmatprep.subr.bf16.mxu0 0
    %505 = vmatpush1.bf16.msra.mxu0 %v488
    %506 = vmatprep.subr.bf16.mxu0 0
    %507 = vmatpush2.bf16.msra.mxu0 0
    %508 = vmatprep.subr.bf16.mxu0 0
    %509 = vmatpush2.bf16.msra.mxu0 0
    %510 = vmatprep.subr.bf16.mxu0 0
    %511 = vmatpush2.bf16.msra.mxu0 0
    %512 = vmatprep.subr.bf16.mxu0 0
    %513 = vmatpush2.bf16.msra.mxu0 0
    %514 = vmatprep.subr.bf16.mxu0 0
    %515 = vmatpush2.bf16.msra.mxu0 0
    %516 = vmatprep.subr.bf16.mxu0 0
    %517 = vmatpush2.bf16.msra.mxu0 0
    %518 = vmatprep.subr.bf16.mxu0 0
    %519 = vmatpush2.bf16.msra.mxu0 0
    %520 = vmatprep.subr.bf16.mxu0 0
    %521 = vmatpush2.bf16.msra.mxu0 0
    %522 = vmatprep.mubr.bf16.mxu0 0
    %523 = vmatmul.mubr.bf16.gmra.mxu0 %v485
    %v524 = vpop.f32.mrf.mxu0
    %v525 = vadd.f32 0.0, %v524
    %v526 = vpop.f32.mrf.mxu0
    %v527 = vpop.f32.mrf.mxu0
    %v528 = vpop.f32.mrf.mxu0
    %529 = vdwg.mxu0
    %530 = vrot.lane.b32.xlu0 %v136, 56
    %v531 = vpop.permute.xlu0 %530
    %v533 = vsel %vm140, %v481, 0
    %v536 = vsel %vm265, %v531, 0
    %538 = vmatprep.subr.bf16.mxu0 0
    %539 = vmatpush1.bf16.msra.mxu0 0
    %540 = vmatprep.subr.bf16.mxu0 0
    %541 = vmatpush1.bf16.msra.mxu0 0
    %542 = vmatprep.subr.bf16.mxu0 0
    %543 = vmatpush1.bf16.msra.mxu0 0
    %544 = vmatprep.subr.bf16.mxu0 0
    %545 = vmatpush1.bf16.msra.mxu0 0
    %546 = vmatprep.subr.bf16.mxu0 0
    %547 = vmatpush1.bf16.msra.mxu0 0
    %548 = vmatprep.subr.bf16.mxu0 0
    %549 = vmatpush1.bf16.msra.mxu0 0
    %550 = vmatprep.subr.bf16.mxu0 0
    %551 = vmatpush1.bf16.msra.mxu0 0
    %552 = vmatprep.subr.bf16.mxu0 0
    %553 = vmatpush1.bf16.msra.mxu0 %v536
    %554 = vmatprep.subr.bf16.mxu0 0
    %555 = vmatpush2.bf16.msra.mxu0 0
    %556 = vmatprep.subr.bf16.mxu0 0
    %557 = vmatpush2.bf16.msra.mxu0 0
    %558 = vmatprep.subr.bf16.mxu0 0
    %559 = vmatpush2.bf16.msra.mxu0 0
    %560 = vmatprep.subr.bf16.mxu0 0
    %561 = vmatpush2.bf16.msra.mxu0 0
    %562 = vmatprep.subr.bf16.mxu0 0
    %563 = vmatpush2.bf16.msra.mxu0 0
    %564 = vmatprep.subr.bf16.mxu0 0
    %565 = vmatpush2.bf16.msra.mxu0 0
    %566 = vmatprep.subr.bf16.mxu0 0
    %567 = vmatpush2.bf16.msra.mxu0 0
    %568 = vmatprep.subr.bf16.mxu0 0
    %569 = vmatpush2.bf16.msra.mxu0 0
    %570 = vmatprep.mubr.bf16.mxu0 0
    %571 = vmatmul.mubr.bf16.gmra.mxu0 %v533
    %v572 = vpop.f32.mrf.mxu0
    %v573 = vadd.f32 0.0, %v572
    %v574 = vpop.f32.mrf.mxu0
    %v575 = vpop.f32.mrf.mxu0
    %v576 = vpop.f32.mrf.mxu0
    %577 = vdwg.mxu0
    %v578 = vpack.c.bf16 %v573, %v525
    %v580 = vsel %vm140, %v578, 0
    %v583 = vsel %vm265, %v132, 0
    %585 = vmatprep.subr.bf16.mxu0 0
    %586 = vmatpush1.bf16.msra.mxu0 0
    %587 = vmatprep.subr.bf16.mxu0 0
    %588 = vmatpush1.bf16.msra.mxu0 0
    %589 = vmatprep.subr.bf16.mxu0 0
    %590 = vmatpush1.bf16.msra.mxu0 0
    %591 = vmatprep.subr.bf16.mxu0 0
    %592 = vmatpush1.bf16.msra.mxu0 0
    %593 = vmatprep.subr.bf16.mxu0 0
    %594 = vmatpush1.bf16.msra.mxu0 0
    %595 = vmatprep.subr.bf16.mxu0 0
    %596 = vmatpush1.bf16.msra.mxu0 0
    %597 = vmatprep.subr.bf16.mxu0 0
    %598 = vmatpush1.bf16.msra.mxu0 0
    %599 = vmatprep.subr.bf16.mxu0 0
    %600 = vmatpush1.bf16.msra.mxu0 %v583
    %601 = vmatprep.subr.bf16.mxu0 0
    %602 = vmatpush2.bf16.msra.mxu0 0
    %603 = vmatprep.subr.bf16.mxu0 0
    %604 = vmatpush2.bf16.msra.mxu0 0
    %605 = vmatprep.subr.bf16.mxu0 0
    %606 = vmatpush2.bf16.msra.mxu0 0
    %607 = vmatprep.subr.bf16.mxu0 0
    %608 = vmatpush2.bf16.msra.mxu0 0
    %609 = vmatprep.subr.bf16.mxu0 0
    %610 = vmatpush2.bf16.msra.mxu0 0
    %611 = vmatprep.subr.bf16.mxu0 0
    %612 = vmatpush2.bf16.msra.mxu0 0
    %613 = vmatprep.subr.bf16.mxu0 0
    %614 = vmatpush2.bf16.msra.mxu0 0
    %615 = vmatprep.subr.bf16.mxu0 0
    %616 = vmatpush2.bf16.msra.mxu0 0
    %617 = vmatprep.mubr.bf16.mxu0 0
    %618 = vmatmul.mubr.bf16.gmra.mxu0 %v580
    %v619 = vpop.f32.mrf.mxu0
    %v620 = vadd.f32 0.0, %v619
    %v621 = vpop.f32.mrf.mxu0
    %v622 = vpop.f32.mrf.mxu0
    %v623 = vadd.f32 0.0, %v622
    %v624 = vpop.f32.mrf.mxu0
    %625 = vdwg.mxu0
    %v627 = vsel %vm140, %v357, 0
    %v630 = vsel %vm265, %v131, 0
    %632 = vmatprep.subr.bf16.mxu0 0
    %633 = vmatpush1.bf16.msra.mxu0 0
    %634 = vmatprep.subr.bf16.mxu0 0
    %635 = vmatpush1.bf16.msra.mxu0 0
    %636 = vmatprep.subr.bf16.mxu0 0
    %637 = vmatpush1.bf16.msra.mxu0 0
    %638 = vmatprep.subr.bf16.mxu0 0
    %639 = vmatpush1.bf16.msra.mxu0 0
    %640 = vmatprep.subr.bf16.mxu0 0
    %641 = vmatpush1.bf16.msra.mxu0 0
    %642 = vmatprep.subr.bf16.mxu0 0
    %643 = vmatpush1.bf16.msra.mxu0 0
    %644 = vmatprep.subr.bf16.mxu0 0
    %645 = vmatpush1.bf16.msra.mxu0 0
    %646 = vmatprep.subr.bf16.mxu0 0
    %647 = vmatpush1.bf16.msra.mxu0 %v630
    %648 = vmatprep.subr.bf16.mxu0 0
    %649 = vmatpush2.bf16.msra.mxu0 0
    %650 = vmatprep.subr.bf16.mxu0 0
    %651 = vmatpush2.bf16.msra.mxu0 0
    %652 = vmatprep.subr.bf16.mxu0 0
    %653 = vmatpush2.bf16.msra.mxu0 0
    %654 = vmatprep.subr.bf16.mxu0 0
    %655 = vmatpush2.bf16.msra.mxu0 0
    %656 = vmatprep.subr.bf16.mxu0 0
    %657 = vmatpush2.bf16.msra.mxu0 0
    %658 = vmatprep.subr.bf16.mxu0 0
    %659 = vmatpush2.bf16.msra.mxu0 0
    %660 = vmatprep.subr.bf16.mxu0 0
    %661 = vmatpush2.bf16.msra.mxu0 0
    %662 = vmatprep.subr.bf16.mxu0 0
    %663 = vmatpush2.bf16.msra.mxu0 0
    %664 = vmatprep.mubr.bf16.mxu0 0
    %665 = vmatmul.mubr.bf16.gmra.mxu0 %v627
    %v666 = vpop.f32.mrf.mxu0
    %v667 = vadd.f32 %v620, %v666
    %v668 = vpop.f32.mrf.mxu0
    %v669 = vpop.f32.mrf.mxu0
    %v670 = vadd.f32 %v623, %v669
    %v671 = vpop.f32.mrf.mxu0
    %672 = vdwg.mxu0
    %673 = vrot.lane.b32.xlu0 %v135, 112
    %v674 = vpop.permute.xlu0 %673
    %675 = vrot.lane.b32.xlu0 %v135, 80
    %v676 = vpop.permute.xlu0 %675
    %v678 = vsel %vm140, %v674, 0
    %v681 = vsel %vm140, %v676, 0
    %683 = vmatprep.subr.bf16.mxu0 0
    %684 = vmatpush1.bf16.xpose.msra.mxu0 0
    %685 = vmatprep.subr.bf16.mxu0 0
    %686 = vmatpush1.bf16.xpose.msra.mxu0 0
    %687 = vmatprep.subr.bf16.mxu0 0
    %688 = vmatpush1.bf16.xpose.msra.mxu0 0
    %689 = vmatprep.subr.bf16.mxu0 0
    %690 = vmatpush1.bf16.xpose.msra.mxu0 0
    %691 = vmatprep.subr.bf16.mxu0 0
    %692 = vmatpush1.bf16.xpose.msra.mxu0 0
    %693 = vmatprep.subr.bf16.mxu0 0
    %694 = vmatpush1.bf16.xpose.msra.mxu0 0
    %695 = vmatprep.subr.bf16.mxu0 0
    %696 = vmatpush1.bf16.xpose.msra.mxu0 0
    %697 = vmatprep.subr.bf16.mxu0 0
    %698 = vmatpush1.bf16.xpose.msra.mxu0 %v681
    %699 = vmatprep.subr.bf16.mxu0 0
    %700 = vmatpush2.bf16.xpose.msra.mxu0 0
    %701 = vmatprep.subr.bf16.mxu0 0
    %702 = vmatpush2.bf16.xpose.msra.mxu0 0
    %703 = vmatprep.subr.bf16.mxu0 0
    %704 = vmatpush2.bf16.xpose.msra.mxu0 0
    %705 = vmatprep.subr.bf16.mxu0 0
    %706 = vmatpush2.bf16.xpose.msra.mxu0 0
    %707 = vmatprep.subr.bf16.mxu0 0
    %708 = vmatpush2.bf16.xpose.msra.mxu0 0
    %709 = vmatprep.subr.bf16.mxu0 0
    %710 = vmatpush2.bf16.xpose.msra.mxu0 0
    %711 = vmatprep.subr.bf16.mxu0 0
    %712 = vmatpush2.bf16.xpose.msra.mxu0 0
    %713 = vmatprep.subr.bf16.mxu0 0
    %714 = vmatpush2.bf16.xpose.msra.mxu0 0
    %715 = vmatprep.mubr.bf16.mxu0 0
    %716 = vmatmul.mubr.bf16.gmra.mxu0 %v678
    %v717 = vpop.f32.mrf.mxu0
    %v718 = vadd.f32 0.0, %v717
    %v719 = vpop.f32.mrf.mxu0
    %v720 = vpop.f32.mrf.mxu0
    %v721 = vpop.f32.mrf.mxu0
    %722 = vdwg.mxu0
    %723 = vrot.lane.b32.xlu0 %v136, 112
    %v724 = vpop.permute.xlu0 %723
    %725 = vrot.lane.b32.xlu0 %v136, 80
    %v726 = vpop.permute.xlu0 %725
    %v728 = vsel %vm140, %v724, 0
    %v731 = vsel %vm140, %v726, 0
    %733 = vmatprep.subr.bf16.mxu0 0
    %734 = vmatpush1.bf16.xpose.msra.mxu0 0
    %735 = vmatprep.subr.bf16.mxu0 0
    %736 = vmatpush1.bf16.xpose.msra.mxu0 0
    %737 = vmatprep.subr.bf16.mxu0 0
    %738 = vmatpush1.bf16.xpose.msra.mxu0 0
    %739 = vmatprep.subr.bf16.mxu0 0
    %740 = vmatpush1.bf16.xpose.msra.mxu0 0
    %741 = vmatprep.subr.bf16.mxu0 0
    %742 = vmatpush1.bf16.xpose.msra.mxu0 0
    %743 = vmatprep.subr.bf16.mxu0 0
    %744 = vmatpush1.bf16.xpose.msra.mxu0 0
    %745 = vmatprep.subr.bf16.mxu0 0
    %746 = vmatpush1.bf16.xpose.msra.mxu0 0
    %747 = vmatprep.subr.bf16.mxu0 0
    %748 = vmatpush1.bf16.xpose.msra.mxu0 %v731
    %749 = vmatprep.subr.bf16.mxu0 0
    %750 = vmatpush2.bf16.xpose.msra.mxu0 0
    %751 = vmatprep.subr.bf16.mxu0 0
    %752 = vmatpush2.bf16.xpose.msra.mxu0 0
    %753 = vmatprep.subr.bf16.mxu0 0
    %754 = vmatpush2.bf16.xpose.msra.mxu0 0
    %755 = vmatprep.subr.bf16.mxu0 0
    %756 = vmatpush2.bf16.xpose.msra.mxu0 0
    %757 = vmatprep.subr.bf16.mxu0 0
    %758 = vmatpush2.bf16.xpose.msra.mxu0 0
    %759 = vmatprep.subr.bf16.mxu0 0
    %760 = vmatpush2.bf16.xpose.msra.mxu0 0
    %761 = vmatprep.subr.bf16.mxu0 0
    %762 = vmatpush2.bf16.xpose.msra.mxu0 0
    %763 = vmatprep.subr.bf16.mxu0 0
    %764 = vmatpush2.bf16.xpose.msra.mxu0 0
    %765 = vmatprep.mubr.bf16.mxu0 0
    %766 = vmatmul.mubr.bf16.gmra.mxu0 %v728
    %v767 = vpop.f32.mrf.mxu0
    %v768 = vadd.f32 0.0, %v767
    %v769 = vpop.f32.mrf.mxu0
    %v770 = vpop.f32.mrf.mxu0
    %v771 = vpop.f32.mrf.mxu0
    %772 = vdwg.mxu0
    %v773 = vsel %vm140, %v718, -inf
    %774 = vmax.xlane.f32.xlu0 %v773
    %v775 = vpop.xlane.xlu0 %774
    %v776 = vsel %vm140, %v768, -inf
    %777 = vmax.xlane.f32.xlu0 %v776
    %v778 = vpop.xlane.xlu0 %777
    %v779 = vsub.f32 %v718, %v775
    %v780 = vsub.f32 %v768, %v778
    %v781 = vmul.f32 %v779, 1.442695
    %v782 = vpow.pop %v781
    %v783 = vmul.f32 %v780, 1.442695
    %v784 = vpow.pop %v783
    %v785 = vsel %vm140, %v782, 0.0
    %786 = vadd.xlane.f32.xlu0 %v785
    %v787 = vpop.xlane.xlu0 %786
    %v788 = vsel %vm140, %v784, 0.0
    %789 = vadd.xlane.f32.xlu0 %v788
    %v790 = vpop.xlane.xlu0 %789
    %v791 = vrcp.pop %v787
    %v792 = vrcp.pop %v790
    %v793 = vmul.f32 %v782, %v791
    %v794 = vmul.f32 %v784, %v792
    %v795 = vpack.c.bf16 %v793, %v793
    %v796 = vpack.c.bf16 %v794, %v794
    %797 = vrot.lane.b32.xlu0 %v135, 48
    %v798 = vpop.permute.xlu0 %797
    %v800 = vsel %vm140, %v795, 0
    %v803 = vsel %vm265, %v798, 0
    %805 = vmatprep.subr.bf16.mxu0 0
    %806 = vmatpush1.bf16.msra.mxu0 0
    %807 = vmatprep.subr.bf16.mxu0 0
    %808 = vmatpush1.bf16.msra.mxu0 0
    %809 = vmatprep.subr.bf16.mxu0 0
    %810 = vmatpush1.bf16.msra.mxu0 0
    %811 = vmatprep.subr.bf16.mxu0 0
    %812 = vmatpush1.bf16.msra.mxu0 0
    %813 = vmatprep.subr.bf16.mxu0 0
    %814 = vmatpush1.bf16.msra.mxu0 0
    %815 = vmatprep.subr.bf16.mxu0 0
    %816 = vmatpush1.bf16.msra.mxu0 0
    %817 = vmatprep.subr.bf16.mxu0 0
    %818 = vmatpush1.bf16.msra.mxu0 0
    %819 = vmatprep.subr.bf16.mxu0 0
    %820 = vmatpush1.bf16.msra.mxu0 %v803
    %821 = vmatprep.subr.bf16.mxu0 0
    %822 = vmatpush2.bf16.msra.mxu0 0
    %823 = vmatprep.subr.bf16.mxu0 0
    %824 = vmatpush2.bf16.msra.mxu0 0
    %825 = vmatprep.subr.bf16.mxu0 0
    %826 = vmatpush2.bf16.msra.mxu0 0
    %827 = vmatprep.subr.bf16.mxu0 0
    %828 = vmatpush2.bf16.msra.mxu0 0
    %829 = vmatprep.subr.bf16.mxu0 0
    %830 = vmatpush2.bf16.msra.mxu0 0
    %831 = vmatprep.subr.bf16.mxu0 0
    %832 = vmatpush2.bf16.msra.mxu0 0
    %833 = vmatprep.subr.bf16.mxu0 0
    %834 = vmatpush2.bf16.msra.mxu0 0
    %835 = vmatprep.subr.bf16.mxu0 0
    %836 = vmatpush2.bf16.msra.mxu0 0
    %837 = vmatprep.mubr.bf16.mxu0 0
    %838 = vmatmul.mubr.bf16.gmra.mxu0 %v800
    %v839 = vpop.f32.mrf.mxu0
    %v840 = vadd.f32 0.0, %v839
    %v841 = vpop.f32.mrf.mxu0
    %v842 = vpop.f32.mrf.mxu0
    %v843 = vpop.f32.mrf.mxu0
    %844 = vdwg.mxu0
    %845 = vrot.lane.b32.xlu0 %v136, 48
    %v846 = vpop.permute.xlu0 %845
    %v848 = vsel %vm140, %v796, 0
    %v851 = vsel %vm265, %v846, 0
    %853 = vmatprep.subr.bf16.mxu0 0
    %854 = vmatpush1.bf16.msra.mxu0 0
    %855 = vmatprep.subr.bf16.mxu0 0
    %856 = vmatpush1.bf16.msra.mxu0 0
    %857 = vmatprep.subr.bf16.mxu0 0
    %858 = vmatpush1.bf16.msra.mxu0 0
    %859 = vmatprep.subr.bf16.mxu0 0
    %860 = vmatpush1.bf16.msra.mxu0 0
    %861 = vmatprep.subr.bf16.mxu0 0
    %862 = vmatpush1.bf16.msra.mxu0 0
    %863 = vmatprep.subr.bf16.mxu0 0
    %864 = vmatpush1.bf16.msra.mxu0 0
    %865 = vmatprep.subr.bf16.mxu0 0
    %866 = vmatpush1.bf16.msra.mxu0 0
    %867 = vmatprep.subr.bf16.mxu0 0
    %868 = vmatpush1.bf16.msra.mxu0 %v851
    %869 = vmatprep.subr.bf16.mxu0 0
    %870 = vmatpush2.bf16.msra.mxu0 0
    %871 = vmatprep.subr.bf16.mxu0 0
    %872 = vmatpush2.bf16.msra.mxu0 0
    %873 = vmatprep.subr.bf16.mxu0 0
    %874 = vmatpush2.bf16.msra.mxu0 0
    %875 = vmatprep.subr.bf16.mxu0 0
    %876 = vmatpush2.bf16.msra.mxu0 0
    %877 = vmatprep.subr.bf16.mxu0 0
    %878 = vmatpush2.bf16.msra.mxu0 0
    %879 = vmatprep.subr.bf16.mxu0 0
    %880 = vmatpush2.bf16.msra.mxu0 0
    %881 = vmatprep.subr.bf16.mxu0 0
    %882 = vmatpush2.bf16.msra.mxu0 0
    %883 = vmatprep.subr.bf16.mxu0 0
    %884 = vmatpush2.bf16.msra.mxu0 0
    %885 = vmatprep.mubr.bf16.mxu0 0
    %886 = vmatmul.mubr.bf16.gmra.mxu0 %v848
    %v887 = vpop.f32.mrf.mxu0
    %v888 = vadd.f32 0.0, %v887
    %v889 = vpop.f32.mrf.mxu0
    %v890 = vpop.f32.mrf.mxu0
    %v891 = vpop.f32.mrf.mxu0
    %892 = vdwg.mxu0
    %v893 = vpack.c.bf16 %v888, %v840
    %v895 = vsel %vm140, %v893, 0
    %v898 = vsel %vm265, %v133, 0
    %900 = vmatprep.subr.bf16.mxu0 0
    %901 = vmatpush1.bf16.msra.mxu0 0
    %902 = vmatprep.subr.bf16.mxu0 0
    %903 = vmatpush1.bf16.msra.mxu0 0
    %904 = vmatprep.subr.bf16.mxu0 0
    %905 = vmatpush1.bf16.msra.mxu0 0
    %906 = vmatprep.subr.bf16.mxu0 0
    %907 = vmatpush1.bf16.msra.mxu0 0
    %908 = vmatprep.subr.bf16.mxu0 0
    %909 = vmatpush1.bf16.msra.mxu0 0
    %910 = vmatprep.subr.bf16.mxu0 0
    %911 = vmatpush1.bf16.msra.mxu0 0
    %912 = vmatprep.subr.bf16.mxu0 0
    %913 = vmatpush1.bf16.msra.mxu0 0
    %914 = vmatprep.subr.bf16.mxu0 0
    %915 = vmatpush1.bf16.msra.mxu0 %v898
    %916 = vmatprep.subr.bf16.mxu0 0
    %917 = vmatpush2.bf16.msra.mxu0 0
    %918 = vmatprep.subr.bf16.mxu0 0
    %919 = vmatpush2.bf16.msra.mxu0 0
    %920 = vmatprep.subr.bf16.mxu0 0
    %921 = vmatpush2.bf16.msra.mxu0 0
    %922 = vmatprep.subr.bf16.mxu0 0
    %923 = vmatpush2.bf16.msra.mxu0 0
    %924 = vmatprep.subr.bf16.mxu0 0
    %925 = vmatpush2.bf16.msra.mxu0 0
    %926 = vmatprep.subr.bf16.mxu0 0
    %927 = vmatpush2.bf16.msra.mxu0 0
    %928 = vmatprep.subr.bf16.mxu0 0
    %929 = vmatpush2.bf16.msra.mxu0 0
    %930 = vmatprep.subr.bf16.mxu0 0
    %931 = vmatpush2.bf16.msra.mxu0 0
    %932 = vmatprep.mubr.bf16.mxu0 0
    %933 = vmatmul.mubr.bf16.gmra.mxu0 %v895
    %v934 = vpop.f32.mrf.mxu0
    %v935 = vadd.f32 0.0, %v934
    %v936 = vpop.f32.mrf.mxu0
    %v937 = vpop.f32.mrf.mxu0
    %v938 = vadd.f32 0.0, %v937
    %v939 = vpop.f32.mrf.mxu0
    %940 = vdwg.mxu0
    %v941 = vadd.f32 %v667, %v935
    %v942 = vadd.f32 %v670, %v938
    %943 = vrot.lane.b32.xlu0 %v135, 104
    %v944 = vpop.permute.xlu0 %943
    %945 = vrot.lane.b32.xlu0 %v135, 72
    %v946 = vpop.permute.xlu0 %945
    %v948 = vsel %vm140, %v944, 0
    %v951 = vsel %vm140, %v946, 0
    %953 = vmatprep.subr.bf16.mxu0 0
    %954 = vmatpush1.bf16.xpose.msra.mxu0 0
    %955 = vmatprep.subr.bf16.mxu0 0
    %956 = vmatpush1.bf16.xpose.msra.mxu0 0
    %957 = vmatprep.subr.bf16.mxu0 0
    %958 = vmatpush1.bf16.xpose.msra.mxu0 0
    %959 = vmatprep.subr.bf16.mxu0 0
    %960 = vmatpush1.bf16.xpose.msra.mxu0 0
    %961 = vmatprep.subr.bf16.mxu0 0
    %962 = vmatpush1.bf16.xpose.msra.mxu0 0
    %963 = vmatprep.subr.bf16.mxu0 0
    %964 = vmatpush1.bf16.xpose.msra.mxu0 0
    %965 = vmatprep.subr.bf16.mxu0 0
    %966 = vmatpush1.bf16.xpose.msra.mxu0 0
    %967 = vmatprep.subr.bf16.mxu0 0
    %968 = vmatpush1.bf16.xpose.msra.mxu0 %v951
    %969 = vmatprep.subr.bf16.mxu0 0
    %970 = vmatpush2.bf16.xpose.msra.mxu0 0
    %971 = vmatprep.subr.bf16.mxu0 0
    %972 = vmatpush2.bf16.xpose.msra.mxu0 0
    %973 = vmatprep.subr.bf16.mxu0 0
    %974 = vmatpush2.bf16.xpose.msra.mxu0 0
    %975 = vmatprep.subr.bf16.mxu0 0
    %976 = vmatpush2.bf16.xpose.msra.mxu0 0
    %977 = vmatprep.subr.bf16.mxu0 0
    %978 = vmatpush2.bf16.xpose.msra.mxu0 0
    %979 = vmatprep.subr.bf16.mxu0 0
    %980 = vmatpush2.bf16.xpose.msra.mxu0 0
    %981 = vmatprep.subr.bf16.mxu0 0
    %982 = vmatpush2.bf16.xpose.msra.mxu0 0
    %983 = vmatprep.subr.bf16.mxu0 0
    %984 = vmatpush2.bf16.xpose.msra.mxu0 0
    %985 = vmatprep.mubr.bf16.mxu0 0
    %986 = vmatmul.mubr.bf16.gmra.mxu0 %v948
    %v987 = vpop.f32.mrf.mxu0
    %v988 = vadd.f32 0.0, %v987
    %v989 = vpop.f32.mrf.mxu0
    %v990 = vpop.f32.mrf.mxu0
    %v991 = vpop.f32.mrf.mxu0
    %992 = vdwg.mxu0
    %993 = vrot.lane.b32.xlu0 %v136, 104
    %v994 = vpop.permute.xlu0 %993
    %995 = vrot.lane.b32.xlu0 %v136, 72
    %v996 = vpop.permute.xlu0 %995
    %v998 = vsel %vm140, %v994, 0
    %v1001 = vsel %vm140, %v996, 0
    %1003 = vmatprep.subr.bf16.mxu0 0
    %1004 = vmatpush1.bf16.xpose.msra.mxu0 0
    %1005 = vmatprep.subr.bf16.mxu0 0
    %1006 = vmatpush1.bf16.xpose.msra.mxu0 0
    %1007 = vmatprep.subr.bf16.mxu0 0
    %1008 = vmatpush1.bf16.xpose.msra.mxu0 0
    %1009 = vmatprep.subr.bf16.mxu0 0
    %1010 = vmatpush1.bf16.xpose.msra.mxu0 0
    %1011 = vmatprep.subr.bf16.mxu0 0
    %1012 = vmatpush1.bf16.xpose.msra.mxu0 0
    %1013 = vmatprep.subr.bf16.mxu0 0
    %1014 = vmatpush1.bf16.xpose.msra.mxu0 0
    %1015 = vmatprep.subr.bf16.mxu0 0
    %1016 = vmatpush1.bf16.xpose.msra.mxu0 0
    %1017 = vmatprep.subr.bf16.mxu0 0
    %1018 = vmatpush1.bf16.xpose.msra.mxu0 %v1001
    %1019 = vmatprep.subr.bf16.mxu0 0
    %1020 = vmatpush2.bf16.xpose.msra.mxu0 0
    %1021 = vmatprep.subr.bf16.mxu0 0
    %1022 = vmatpush2.bf16.xpose.msra.mxu0 0
    %1023 = vmatprep.subr.bf16.mxu0 0
    %1024 = vmatpush2.bf16.xpose.msra.mxu0 0
    %1025 = vmatprep.subr.bf16.mxu0 0
    %1026 = vmatpush2.bf16.xpose.msra.mxu0 0
    %1027 = vmatprep.subr.bf16.mxu0 0
    %1028 = vmatpush2.bf16.xpose.msra.mxu0 0
    %1029 = vmatprep.subr.bf16.mxu0 0
    %1030 = vmatpush2.bf16.xpose.msra.mxu0 0
    %1031 = vmatprep.subr.bf16.mxu0 0
    %1032 = vmatpush2.bf16.xpose.msra.mxu0 0
    %1033 = vmatprep.subr.bf16.mxu0 0
    %1034 = vmatpush2.bf16.xpose.msra.mxu0 0
    %1035 = vmatprep.mubr.bf16.mxu0 0
    %1036 = vmatmul.mubr.bf16.gmra.mxu0 %v998
    %v1037 = vpop.f32.mrf.mxu0
    %v1038 = vadd.f32 0.0, %v1037
    %v1039 = vpop.f32.mrf.mxu0
    %v1040 = vpop.f32.mrf.mxu0
    %v1041 = vpop.f32.mrf.mxu0
    %1042 = vdwg.mxu0
    %v1043 = vsel %vm140, %v988, -inf
    %1044 = vmax.xlane.f32.xlu0 %v1043
    %v1045 = vpop.xlane.xlu0 %1044
    %v1046 = vsel %vm140, %v1038, -inf
    %1047 = vmax.xlane.f32.xlu0 %v1046
    %v1048 = vpop.xlane.xlu0 %1047
    %v1049 = vsub.f32 %v988, %v1045
    %v1050 = vsub.f32 %v1038, %v1048
    %v1051 = vmul.f32 %v1049, 1.442695
    %v1052 = vpow.pop %v1051
    %v1053 = vmul.f32 %v1050, 1.442695
    %v1054 = vpow.pop %v1053
    %v1055 = vsel %vm140, %v1052, 0.0
    %1056 = vadd.xlane.f32.xlu0 %v1055
    %v1057 = vpop.xlane.xlu0 %1056
    %v1058 = vsel %vm140, %v1054, 0.0
    %1059 = vadd.xlane.f32.xlu0 %v1058
    %v1060 = vpop.xlane.xlu0 %1059
    %v1061 = vrcp.pop %v1057
    %v1062 = vrcp.pop %v1060
    %v1063 = vmul.f32 %v1052, %v1061
    %v1064 = vmul.f32 %v1054, %v1062
    %v1065 = vpack.c.bf16 %v1063, %v1063
    %v1066 = vpack.c.bf16 %v1064, %v1064
    %1067 = vrot.lane.b32.xlu0 %v135, 40
    %v1068 = vpop.permute.xlu0 %1067
    %v1070 = vsel %vm140, %v1065, 0
    %v1073 = vsel %vm265, %v1068, 0
    %1075 = vmatprep.subr.bf16.mxu0 0
    %1076 = vmatpush1.bf16.msra.mxu0 0
    %1077 = vmatprep.subr.bf16.mxu0 0
    %1078 = vmatpush1.bf16.msra.mxu0 0
    %1079 = vmatprep.subr.bf16.mxu0 0
    %1080 = vmatpush1.bf16.msra.mxu0 0
    %1081 = vmatprep.subr.bf16.mxu0 0
    %1082 = vmatpush1.bf16.msra.mxu0 0
    %1083 = vmatprep.subr.bf16.mxu0 0
    %1084 = vmatpush1.bf16.msra.mxu0 0
    %1085 = vmatprep.subr.bf16.mxu0 0
    %1086 = vmatpush1.bf16.msra.mxu0 0
    %1087 = vmatprep.subr.bf16.mxu0 0
    %1088 = vmatpush1.bf16.msra.mxu0 0
    %1089 = vmatprep.subr.bf16.mxu0 0
    %1090 = vmatpush1.bf16.msra.mxu0 %v1073
    %1091 = vmatprep.subr.bf16.mxu0 0
    %1092 = vmatpush2.bf16.msra.mxu0 0
    %1093 = vmatprep.subr.bf16.mxu0 0
    %1094 = vmatpush2.bf16.msra.mxu0 0
    %1095 = vmatprep.subr.bf16.mxu0 0
    %1096 = vmatpush2.bf16.msra.mxu0 0
    %1097 = vmatprep.subr.bf16.mxu0 0
    %1098 = vmatpush2.bf16.msra.mxu0 0
    %1099 = vmatprep.subr.bf16.mxu0 0
    %1100 = vmatpush2.bf16.msra.mxu0 0
    %1101 = vmatprep.subr.bf16.mxu0 0
    %1102 = vmatpush2.bf16.msra.mxu0 0
    %1103 = vmatprep.subr.bf16.mxu0 0
    %1104 = vmatpush2.bf16.msra.mxu0 0
    %1105 = vmatprep.subr.bf16.mxu0 0
    %1106 = vmatpush2.bf16.msra.mxu0 0
    %1107 = vmatprep.mubr.bf16.mxu0 0
    %1108 = vmatmul.mubr.bf16.gmra.mxu0 %v1070
    %v1109 = vpop.f32.mrf.mxu0
    %v1110 = vadd.f32 0.0, %v1109
    %v1111 = vpop.f32.mrf.mxu0
    %v1112 = vpop.f32.mrf.mxu0
    %v1113 = vpop.f32.mrf.mxu0
    %1114 = vdwg.mxu0
    %1115 = vrot.lane.b32.xlu0 %v136, 40
    %v1116 = vpop.permute.xlu0 %1115
    %v1118 = vsel %vm140, %v1066, 0
    %v1121 = vsel %vm265, %v1116, 0
    %1123 = vmatprep.subr.bf16.mxu0 0
    %1124 = vmatpush1.bf16.msra.mxu0 0
    %1125 = vmatprep.subr.bf16.mxu0 0
    %1126 = vmatpush1.bf16.msra.mxu0 0
    %1127 = vmatprep.subr.bf16.mxu0 0
    %1128 = vmatpush1.bf16.msra.mxu0 0
    %1129 = vmatprep.subr.bf16.mxu0 0
    %1130 = vmatpush1.bf16.msra.mxu0 0
    %1131 = vmatprep.subr.bf16.mxu0 0
    %1132 = vmatpush1.bf16.msra.mxu0 0
    %1133 = vmatprep.subr.bf16.mxu0 0
    %1134 = vmatpush1.bf16.msra.mxu0 0
    %1135 = vmatprep.subr.bf16.mxu0 0
    %1136 = vmatpush1.bf16.msra.mxu0 0
    %1137 = vmatprep.subr.bf16.mxu0 0
    %1138 = vmatpush1.bf16.msra.mxu0 %v1121
    %1139 = vmatprep.subr.bf16.mxu0 0
    %1140 = vmatpush2.bf16.msra.mxu0 0
    %1141 = vmatprep.subr.bf16.mxu0 0
    %1142 = vmatpush2.bf16.msra.mxu0 0
    %1143 = vmatprep.subr.bf16.mxu0 0
    %1144 = vmatpush2.bf16.msra.mxu0 0
    %1145 = vmatprep.subr.bf16.mxu0 0
    %1146 = vmatpush2.bf16.msra.mxu0 0
    %1147 = vmatprep.subr.bf16.mxu0 0
    %1148 = vmatpush2.bf16.msra.mxu0 0
    %1149 = vmatprep.subr.bf16.mxu0 0
    %1150 = vmatpush2.bf16.msra.mxu0 0
    %1151 = vmatprep.subr.bf16.mxu0 0
    %1152 = vmatpush2.bf16.msra.mxu0 0
    %1153 = vmatprep.subr.bf16.mxu0 0
    %1154 = vmatpush2.bf16.msra.mxu0 0
    %1155 = vmatprep.mubr.bf16.mxu0 0
    %1156 = vmatmul.mubr.bf16.gmra.mxu0 %v1118
    %v1157 = vpop.f32.mrf.mxu0
    %v1158 = vadd.f32 0.0, %v1157
    %v1159 = vpop.f32.mrf.mxu0
    %v1160 = vpop.f32.mrf.mxu0
    %v1161 = vpop.f32.mrf.mxu0
    %1162 = vdwg.mxu0
    %v1163 = vpack.c.bf16 %v1158, %v1110
    %v1165 = vsel %vm140, %v1163, 0
    %v1168 = vsel %vm265, %v134, 0
    %1170 = vmatprep.subr.bf16.mxu0 0
    %1171 = vmatpush1.bf16.msra.mxu0 0
    %1172 = vmatprep.subr.bf16.mxu0 0
    %1173 = vmatpush1.bf16.msra.mxu0 0
    %1174 = vmatprep.subr.bf16.mxu0 0
    %1175 = vmatpush1.bf16.msra.mxu0 0
    %1176 = vmatprep.subr.bf16.mxu0 0
    %1177 = vmatpush1.bf16.msra.mxu0 0
    %1178 = vmatprep.subr.bf16.mxu0 0
    %1179 = vmatpush1.bf16.msra.mxu0 0
    %1180 = vmatprep.subr.bf16.mxu0 0
    %1181 = vmatpush1.bf16.msra.mxu0 0
    %1182 = vmatprep.subr.bf16.mxu0 0
    %1183 = vmatpush1.bf16.msra.mxu0 0
    %1184 = vmatprep.subr.bf16.mxu0 0
    %1185 = vmatpush1.bf16.msra.mxu0 %v1168
    %1186 = vmatprep.subr.bf16.mxu0 0
    %1187 = vmatpush2.bf16.msra.mxu0 0
    %1188 = vmatprep.subr.bf16.mxu0 0
    %1189 = vmatpush2.bf16.msra.mxu0 0
    %1190 = vmatprep.subr.bf16.mxu0 0
    %1191 = vmatpush2.bf16.msra.mxu0 0
    %1192 = vmatprep.subr.bf16.mxu0 0
    %1193 = vmatpush2.bf16.msra.mxu0 0
    %1194 = vmatprep.subr.bf16.mxu0 0
    %1195 = vmatpush2.bf16.msra.mxu0 0
    %1196 = vmatprep.subr.bf16.mxu0 0
    %1197 = vmatpush2.bf16.msra.mxu0 0
    %1198 = vmatprep.subr.bf16.mxu0 0
    %1199 = vmatpush2.bf16.msra.mxu0 0
    %1200 = vmatprep.subr.bf16.mxu0 0
    %1201 = vmatpush2.bf16.msra.mxu0 0
    %1202 = vmatprep.mubr.bf16.mxu0 0
    %1203 = vmatmul.mubr.bf16.gmra.mxu0 %v1165
    %v1204 = vpop.f32.mrf.mxu0
    %v1205 = vadd.f32 0.0, %v1204
    %v1206 = vpop.f32.mrf.mxu0
    %v1207 = vpop.f32.mrf.mxu0
    %v1208 = vadd.f32 0.0, %v1207
    %v1209 = vpop.f32.mrf.mxu0
    %1210 = vdwg.mxu0
    %v1211 = vadd.f32 %v941, %v1205
    %v1212 = vadd.f32 %v942, %v1208
    %v1213 = vld [vmem:[%s4] sm:$0x1]
    %v1215 = vlaneseq
    %v1216 = vshrl.u32 %v1215, 7
    %v1217 = vsub.s32 0, %v1216
    %v1218 = vrot.slane %v1213, %v1217
    %v1220 = vadd.f32 %v1211, %v1218
    %v1221 = vadd.f32 %v1212, %v1218
    %v1222 = vadd.f32 %v60, %v1220
    %v1223 = vadd.f32 %v61, %v1221
    %v1224 = vsel %vm86, %v1222, 0.0
    %1225 = vadd.xlane.f32.xlu0 %v1224
    %v1226 = vpop.xlane.xlu0 %1225
    %v1227 = vsel %vm86, %v1223, 0.0
    %1228 = vadd.xlane.f32.xlu0 %v1227
    %v1229 = vpop.xlane.xlu0 %1228
    %v1230 = vrcp.pop 32.0
    %v1231 = vmul.f32 %v1226, %v1230
    %v1232 = vmul.f32 %v1229, %v1230
    %v1233 = vsub.f32 %v1222, %v1231
    %v1234 = vsub.f32 %v1223, %v1232
    %v1235 = vmul.f32 %v1233, %v1233
    %v1236 = vmul.f32 %v1234, %v1234
    %v1237 = vsel %vm86, %v1235, 0.0
    %1238 = vadd.xlane.f32.xlu0 %v1237
    %v1239 = vpop.xlane.xlu0 %1238
    %v1240 = vsel %vm86, %v1236, 0.0
    %1241 = vadd.xlane.f32.xlu0 %v1240
    %v1242 = vpop.xlane.xlu0 %1241
    %v1243 = vmul.f32 %v1239, %v1230
    %v1244 = vmul.f32 %v1242, %v1230
    %v1245 = vadd.f32 %v1243, 1e-05
    %v1246 = vadd.f32 %v1244, 1e-05
    %v1247 = vrsqrt.pop %v1245
    %v1248 = vrsqrt.pop %v1246
    %v1249 = vmul.f32 %v1233, %v1247
    %v1250 = vmul.f32 %v1234, %v1248
    %v1251 = vld [vmem:[%s9] sm:$0x1]
    %v1253 = vlaneseq
    %v1254 = vshrl.u32 %v1253, 7
    %v1255 = vsub.s32 0, %v1254
    %v1256 = vrot.slane %v1251, %v1255
    %v1258 = vmul.f32 %v1249, %v1256
    %v1259 = vmul.f32 %v1250, %v1256
    %v1260 = vld [vmem:[%s10] sm:$0x1]
    %v1262 = vlaneseq
    %v1263 = vshrl.u32 %v1262, 7
    %v1264 = vsub.s32 0, %v1263
    %v1265 = vrot.slane %v1260, %v1264
    %v1267 = vadd.f32 %v1258, %v1265
    %v1268 = vadd.f32 %v1259, %v1265
    %v1269 = vpack.c.bf16 %v1268, %v1267
    %v1270 = vld [vmem:[#allocation2] sm:$0xf]
    %v1271 = vld [vmem:[#allocation2 + $0x4] sm:$0xf]
    %v1272 = vld [vmem:[#allocation2 + $0x8] sm:$0xf]
    %v1273 = vld [vmem:[#allocation2 + $0xc] sm:$0xf]
    %v1274 = vld [vmem:[%s6] sm:$0x1]
    %v1276 = vlaneseq
    %v1277 = vshrl.u32 %v1276, 7
    %v1278 = vsub.s32 0, %v1277
    %v1279 = vrot.slane %v1274, %v1278
    %v1285 = vunpack.c.l.b16 %v1270
    %v1286 = vunpack.c.l.b16 %v1271
    %v1287 = vunpack.c.l.b16 %v1272
    %v1288 = vunpack.c.l.b16 %v1273
    %v1289 = vpack.c.b16 %v1286, %v1285
    %v1290 = vpack.c.b16 %v1288, %v1287
    %v1294 = vsel %vm86, %v1269, 0
    %1296 = vmatprep.subr.bf16.mxu0 0
    %1297 = vmatpush1.bf16.msra.mxu0 0
    %1298 = vmatprep.subr.bf16.mxu0 0
    %1299 = vmatpush1.bf16.msra.mxu0 0
    %1300 = vmatprep.subr.bf16.mxu0 0
    %1301 = vmatpush1.bf16.msra.mxu0 0
    %1302 = vmatprep.subr.bf16.mxu0 0
    %1303 = vmatpush1.bf16.msra.mxu0 0
    %1304 = vmatprep.subr.bf16.mxu0 0
    %1305 = vmatpush1.bf16.msra.mxu0 0
    %1306 = vmatprep.subr.bf16.mxu0 0
    %1307 = vmatpush1.bf16.msra.mxu0 0
    %1308 = vmatprep.subr.bf16.mxu0 0
    %1309 = vmatpush1.bf16.msra.mxu0 %v1290
    %1310 = vmatprep.subr.bf16.mxu0 0
    %1311 = vmatpush1.bf16.msra.mxu0 %v1289
    %1312 = vmatprep.subr.bf16.mxu0 0
    %1313 = vmatpush2.bf16.msra.mxu0 0
    %1314 = vmatprep.subr.bf16.mxu0 0
    %1315 = vmatpush2.bf16.msra.mxu0 0
    %1316 = vmatprep.subr.bf16.mxu0 0
    %1317 = vmatpush2.bf16.msra.mxu0 0
    %1318 = vmatprep.subr.bf16.mxu0 0
    %1319 = vmatpush2.bf16.msra.mxu0 0
    %1320 = vmatprep.subr.bf16.mxu0 0
    %1321 = vmatpush2.bf16.msra.mxu0 0
    %1322 = vmatprep.subr.bf16.mxu0 0
    %1323 = vmatpush2.bf16.msra.mxu0 0
    %1324 = vmatprep.subr.bf16.mxu0 0
    %1325 = vmatpush2.bf16.msra.mxu0 0
    %1326 = vmatprep.subr.bf16.mxu0 0
    %1327 = vmatpush2.bf16.msra.mxu0 0
    %1328 = vmatprep.mubr.bf16.mxu0 0
    %1329 = vmatmul.mubr.bf16.gmra.mxu0 %v1294
    %v1330 = vpop.f32.mrf.mxu0
    %v1331 = vadd.f32 %v1279, %v1330
    %v1332 = vpop.f32.mrf.mxu0
    %v1333 = vpop.f32.mrf.mxu0
    %v1334 = vadd.f32 %v1279, %v1333
    %v1335 = vpop.f32.mrf.mxu0
    %1336 = vdwg.mxu0
    %v1337 = vmax.f32 %v1331, 0.0
    %v1338 = vmax.f32 %v1334, 0.0
    %v1339 = vpack.c.bf16 %v1338, %v1337
    %v1340 = vld [vmem:[%s7] sm:$0xf]
    %v1341 = vld [vmem:[%s7 + $0x4] sm:$0xf]
    %v1342 = vld [vmem:[%s7 + $0x8] sm:$0xf]
    %v1343 = vld [vmem:[%s7 + $0xc] sm:$0xf]
    %v1344 = vld [vmem:[%s7 + $0x10] sm:$0xf]
    %v1345 = vld [vmem:[%s7 + $0x14] sm:$0xf]
    %v1346 = vld [vmem:[%s7 + $0x18] sm:$0xf]
    %v1347 = vld [vmem:[%s7 + $0x1c] sm:$0xf]
    %v1348 = vld [vmem:[%s8] sm:$0x1]
    %v1350 = vlaneseq
    %v1351 = vshrl.u32 %v1350, 7
    %v1352 = vsub.s32 0, %v1351
    %v1353 = vrot.slane %v1348, %v1352
    %v1363 = vunpack.c.l.b16 %v1340
    %v1364 = vunpack.c.l.b16 %v1341
    %v1365 = vunpack.c.l.b16 %v1342
    %v1366 = vunpack.c.l.b16 %v1343
    %v1367 = vunpack.c.l.b16 %v1344
    %v1368 = vunpack.c.l.b16 %v1345
    %v1369 = vunpack.c.l.b16 %v1346
    %v1370 = vunpack.c.l.b16 %v1347
    %v1371 = vpack.c.b16 %v1364, %v1363
    %v1372 = vpack.c.b16 %v1366, %v1365
    %v1373 = vpack.c.b16 %v1368, %v1367
    %v1374 = vpack.c.b16 %v1370, %v1369
    %vm1379 = vcmask 523264
    %v1381 = vsel %vm1379, %v1339, 0
    %1383 = vmatprep.subr.bf16.mxu0 0
    %1384 = vmatpush1.bf16.msra.mxu0 0
    %1385 = vmatprep.subr.bf16.mxu0 0
    %1386 = vmatpush1.bf16.msra.mxu0 0
    %1387 = vmatprep.subr.bf16.mxu0 0
    %1388 = vmatpush1.bf16.msra.mxu0 0
    %1389 = vmatprep.subr.bf16.mxu0 0
    %1390 = vmatpush1.bf16.msra.mxu0 0
    %1391 = vmatprep.subr.bf16.mxu0 0
    %1392 = vmatpush1.bf16.msra.mxu0 %v1374
    %1393 = vmatprep.subr.bf16.mxu0 0
    %1394 = vmatpush1.bf16.msra.mxu0 %v1373
    %1395 = vmatprep.subr.bf16.mxu0 0
    %1396 = vmatpush1.bf16.msra.mxu0 %v1372
    %1397 = vmatprep.subr.bf16.mxu0 0
    %1398 = vmatpush1.bf16.msra.mxu0 %v1371
    %1399 = vmatprep.subr.bf16.mxu0 0
    %1400 = vmatpush2.bf16.msra.mxu0 0
    %1401 = vmatprep.subr.bf16.mxu0 0
    %1402 = vmatpush2.bf16.msra.mxu0 0
    %1403 = vmatprep.subr.bf16.mxu0 0
    %1404 = vmatpush2.bf16.msra.mxu0 0
    %1405 = vmatprep.subr.bf16.mxu0 0
    %1406 = vmatpush2.bf16.msra.mxu0 0
    %1407 = vmatprep.subr.bf16.mxu0 0
    %1408 = vmatpush2.bf16.msra.mxu0 0
    %1409 = vmatprep.subr.bf16.mxu0 0
    %1410 = vmatpush2.bf16.msra.mxu0 0
    %1411 = vmatprep.subr.bf16.mxu0 0
    %1412 = vmatpush2.bf16.msra.mxu0 0
    %1413 = vmatprep.subr.bf16.mxu0 0
    %1414 = vmatpush2.bf16.msra.mxu0 0
    %1415 = vmatprep.mubr.bf16.mxu0 0
    %1416 = vmatmul.mubr.bf16.gmra.mxu0 %v1381
    %v1417 = vpop.f32.mrf.mxu0
    %v1418 = vadd.f32 %v1353, %v1417
    %v1419 = vpop.f32.mrf.mxu0
    %v1420 = vpop.f32.mrf.mxu0
    %v1421 = vadd.f32 %v1353, %v1420
    %v1422 = vpop.f32.mrf.mxu0
    %1423 = vdwg.mxu0
    %v1424 = vadd.f32 %v1267, %v1418
    %v1425 = vadd.f32 %v1268, %v1421
    %v1426 = vsel %vm86, %v1424, 0.0
    %1427 = vadd.xlane.f32.xlu0 %v1426
    %v1428 = vpop.xlane.xlu0 %1427
    %v1429 = vsel %vm86, %v1425, 0.0
    %1430 = vadd.xlane.f32.xlu0 %v1429
    %v1431 = vpop.xlane.xlu0 %1430
    %v1432 = vmul.f32 %v1428, %v1230
    %v1433 = vmul.f32 %v1431, %v1230
    %v1434 = vsub.f32 %v1424, %v1432
    %v1435 = vsub.f32 %v1425, %v1433
    %v1436 = vmul.f32 %v1434, %v1434
    %v1437 = vmul.f32 %v1435, %v1435
    %v1438 = vsel %vm86, %v1436, 0.0
    %1439 = vadd.xlane.f32.xlu0 %v1438
    %v1440 = vpop.xlane.xlu0 %1439
    %v1441 = vsel %vm86, %v1437, 0.0
    %1442 = vadd.xlane.f32.xlu0 %v1441
    %v1443 = vpop.xlane.xlu0 %1442
    %v1444 = vmul.f32 %v1440, %v1230
    %v1445 = vmul.f32 %v1443, %v1230
    %v1446 = vadd.f32 %v1444, 1e-05
    %v1447 = vadd.f32 %v1445, 1e-05
    %v1448 = vrsqrt.pop %v1446
    %v1449 = vrsqrt.pop %v1447
    %v1450 = vmul.f32 %v1434, %v1448
    %v1451 = vmul.f32 %v1435, %v1449
    %v1452 = vld [vmem:[%s11] sm:$0x1]
    %v1454 = vlaneseq
    %v1455 = vshrl.u32 %v1454, 7
    %v1456 = vsub.s32 0, %v1455
    %v1457 = vrot.slane %v1452, %v1456
    %v1459 = vmul.f32 %v1450, %v1457
    %v1460 = vmul.f32 %v1451, %v1457
    %v1461 = vld [vmem:[%s12] sm:$0x1]
    %v1463 = vlaneseq
    %v1464 = vshrl.u32 %v1463, 7
    %v1465 = vsub.s32 0, %v1464
    %v1466 = vrot.slane %v1461, %v1465
    %v1468 = vadd.f32 %v1459, %v1466
    %v1469 = vadd.f32 %v1460, %v1466
    %1470 = vst.msk [vmem:[#allocation5] sm:$0xff] %vm86, %v1468
    %1471 = vst.msk [vmem:[#allocation5 + $0x8] sm:$0xff] %vm86, %v1469
    // Predicated region
    $region58: #{tpu_custom_call.1} parent=1 // pred_check
      _
    $region59: #{tpu_custom_call.1} parent=1 // pred_check_branch
      %1473 = sbr.rel (0) target = $region61
    $region60: #{tpu_custom_call.1} parent=1 // pred_region
      %s1475 = ssub.s32 256, 256
      %1476 = vsyncadd [#allocation4], %s1475
      %s1477 = sshll.u32 [#allocation5], 4
      %s1478 = int_to_ptr.vmem [resolvable:$true] %s1477
      %1483 = dma.vmem_to_hbm [thread:$0]  %s1478, 256, %s13, [#allocation4], 128, 128, 8
    $region61: #{tpu_custom_call.1} parent=1 // pred_fallthru
      _
    // Predicated region
    $region62: #{tpu_custom_call.1} parent=1 // pred_check
      _
    $region63: #{tpu_custom_call.1} parent=1 // pred_check_branch
      %1485 = sbr.rel (0) target = $region65
    $region64: #{tpu_custom_call.1} parent=1 // pred_region
      %1486 = dma.done [#allocation4], 256
    $region65: #{tpu_custom_call.1} parent=1 // pred_fallthru
      _
    %1487 = vsyncpa [#allocation3], 1
    %1488 = vsyncpa [#allocation4], 1

</llo_original>
